<compile_context>
chip_gen: v6e
topology: v6e:2x2x1
jax: 0.10.0
libtpu: 0.0.40
codegen_flags: <defaults>
</compile_context>

<pallas_src>
import functools

import jax
import jax.numpy as jnp
from jax.experimental import pallas as pl
from jax.experimental.pallas import tpu as pltpu

EPS = 1e-5          # BatchNorm2d default eps
NEG_SLOPE = 0.2     # LeakyReLU slope
LANE = 128          # TPU lane width; Cout padded to a multiple of this
TARGET_TM = 512     # row-tile target (~85% HBM roofline per tiling sweep)


# ----------------------------------------------------------------------------
# Small helpers
# ----------------------------------------------------------------------------
def _round_up(x, n):
    return ((x + n - 1) // n) * n


_VMEM_LIMIT_CACHE = [None]


def _vmem_limit_bytes():
    # Re-derive the scoped VMEM budget per chip (v7x has half the VMEM of v6e).
    if _VMEM_LIMIT_CACHE[0] is None:
        try:
            cap = int(pltpu.get_tpu_info().vmem_capacity_bytes)
        except Exception:
            cap = 64 << 20  # conservative fallback (v7x physical per-core VMEM)
        _VMEM_LIMIT_CACHE[0] = int(min(cap // 2, 64 << 20))
    return _VMEM_LIMIT_CACHE[0]


def _pick_tm(m, k, cpad, vmem_budget):
    # Rough double-buffered per-row footprint: bf16 patches + f32 z output.
    row_bytes = 2 * (2 * k + 4 * cpad)
    cap = max(8, (vmem_budget // 2) // max(row_bytes, 1))
    target = min(TARGET_TM, cap, m)
    for tm in (512, 256, 128, 64, 32, 16, 8):
        if tm <= target and m % tm == 0:
            return tm
    return m   # fall back to a single full-M block (always (8,128)-legal)


def _pad_last(a, target):
    pad = target - a.shape[-1]
    if pad <= 0:
        return a
    return jnp.pad(a, [(0, 0)] * (a.ndim - 1) + [(0, pad)])


# ----------------------------------------------------------------------------
# Pallas kernels
# ----------------------------------------------------------------------------
def _matmul_stats_kernel(p_ref, w_ref, b_ref, z_ref, ssum_ref, ssq_ref):
    # p: (TM, K) bf16 patches;  w: (K, Cpad) bf16;  b: (1, Cpad) f32
    z = jnp.dot(p_ref[...], w_ref[...], preferred_element_type=jnp.float32)
    z = z + b_ref[...]
    z_ref[...] = z                      # Cpad is a multiple of 128 -> lane-dense stores

    @pl.when(pl.program_id(0) == 0)
    def _init():
        ssum_ref[...] = jnp.zeros_like(ssum_ref)
        ssq_ref[...] = jnp.zeros_like(ssq_ref)

    # Global BatchNorm statistics accumulated across all M tiles (f32).
    ssum_ref[...] += jnp.sum(z, axis=0, keepdims=True)
    ssq_ref[...] += jnp.sum(z * z, axis=0, keepdims=True)


def _bn_lrelu_kernel(z_ref, ssum_ref, ssq_ref, g_ref, beta_ref, o_ref, *, inv_m):
    # Training-mode BN with biased stats over all rows; E[x^2]-E[x]^2 in f32.
    mean = ssum_ref[...] * inv_m
    var = jnp.maximum(ssq_ref[...] * inv_m - mean * mean, 0.0)
    zn = (z_ref[...] - mean) * jax.lax.rsqrt(var + EPS)
    y = g_ref[...] * zn + beta_ref[...]
    o_ref[...] = jnp.where(y > 0, y, NEG_SLOPE * y).astype(o_ref.dtype)


def _bn_lrelu_pool_kernel(z_ref, ssum_ref, ssq_ref, g_ref, beta_ref, o_ref, *, inv_m):
    # Same as above, plus the spatial sum-pool fused into the epilogue.
    mean = ssum_ref[...] * inv_m
    var = jnp.maximum(ssq_ref[...] * inv_m - mean * mean, 0.0)
    zn = (z_ref[0] - mean) * jax.lax.rsqrt(var + EPS)       # (S, Cpad)
    y = g_ref[...] * zn + beta_ref[...]
    y = jnp.where(y > 0, y, NEG_SLOPE * y)
    o_ref[0] = jnp.sum(y, axis=0, keepdims=True)            # (1, Cpad)


def _head_kernel(y_ref, h_ref, wl_ref, bl_ref, we_ref, be_ref, o_ref):
    # y_ref: (B,) int32 labels in SMEM (scalar prefetch); per grid step = one batch elem.
    b = pl.program_id(0)
    h = h_ref[0]                                             # (1, Cpad) pooled features
    lin = jnp.sum(h * wl_ref[...], axis=1, keepdims=True) + bl_ref[...]   # (1, 1)
    # Row gather of the class embedding (replaces the one-hot MXU matmul).
    w_y = we_ref[pl.ds(y_ref[b], 1), :] + be_ref[...]        # (1, Cpad)
    proj = jnp.sum(w_y * h, axis=1, keepdims=True)           # (1, 1)
    o_ref[0] = lin + proj


# ----------------------------------------------------------------------------
# pallas_call wrappers
# ----------------------------------------------------------------------------
def _conv_matmul_stats(patches, w_mat, bias_p, cpad):
    m, k = patches.shape
    tm = _pick_tm(m, k, cpad, _vmem_limit_bytes())
    z, ssum, ssq = pl.pallas_call(
        _matmul_stats_kernel,
        grid=(m // tm,),
        in_specs=(
            pl.BlockSpec((tm, k), lambda i: (i, 0)),
            pl.BlockSpec((k, cpad), lambda i: (0, 0)),
            pl.BlockSpec((1, cpad), lambda i: (0, 0)),
        ),
        out_specs=(
            pl.BlockSpec((tm, cpad), lambda i: (i, 0)),
            pl.BlockSpec((1, cpad), lambda i: (0, 0)),   # revisited: stats accumulator
            pl.BlockSpec((1, cpad), lambda i: (0, 0)),
        ),
        out_shape=(
            jax.ShapeDtypeStruct((m, cpad), jnp.float32),
            jax.ShapeDtypeStruct((1, cpad), jnp.float32),
            jax.ShapeDtypeStruct((1, cpad), jnp.float32),
        ),
        compiler_params=pltpu.CompilerParams(
            dimension_semantics=("arbitrary",),   # stats accumulate across M tiles
            vmem_limit_bytes=_vmem_limit_bytes()),
    )(patches, w_mat, bias_p)
    return z, ssum, ssq, tm


def _bn_lrelu(z, ssum, ssq, gamma_p, beta_p, tm, out_dtype=jnp.bfloat16):
    m, cpad = z.shape
    return pl.pallas_call(
        functools.partial(_bn_lrelu_kernel, inv_m=1.0 / m),
        grid=(m // tm,),
        in_specs=(
            pl.BlockSpec((tm, cpad), lambda i: (i, 0)),
            pl.BlockSpec((1, cpad), lambda i: (0, 0)),
            pl.BlockSpec((1, cpad), lambda i: (0, 0)),
            pl.BlockSpec((1, cpad), lambda i: (0, 0)),
            pl.BlockSpec((1, cpad), lambda i: (0, 0)),
        ),
        out_specs=pl.BlockSpec((tm, cpad), lambda i: (i, 0)),
        out_shape=jax.ShapeDtypeStruct((m, cpad), out_dtype),
        compiler_params=pltpu.CompilerParams(
            dimension_semantics=("parallel",),
            vmem_limit_bytes=_vmem_limit_bytes()),
    )(z, ssum, ssq, gamma_p, beta_p)


def _bn_lrelu_pool(z3, ssum, ssq, gamma_p, beta_p):
    bsz, s, cpad = z3.shape
    m = bsz * s
    return pl.pallas_call(
        functools.partial(_bn_lrelu_pool_kernel, inv_m=1.0 / m),
        grid=(bsz,),
        in_specs=(
            pl.BlockSpec((1, s, cpad), lambda b: (b, 0, 0)),
            pl.BlockSpec((1, cpad), lambda b: (0, 0)),
            pl.BlockSpec((1, cpad), lambda b: (0, 0)),
            pl.BlockSpec((1, cpad), lambda b: (0, 0)),
            pl.BlockSpec((1, cpad), lambda b: (0, 0)),
        ),
        out_specs=pl.BlockSpec((1, 1, cpad), lambda b: (b, 0, 0)),
        out_shape=jax.ShapeDtypeStruct((bsz, 1, cpad), jnp.float32),
        compiler_params=pltpu.CompilerParams(
            dimension_semantics=("parallel",),
            vmem_limit_bytes=_vmem_limit_bytes()),
    )(z3, ssum, ssq, gamma_p, beta_p)


def _head(h_pool, y, wl_p, bl_p, we_p, be_p):
    bsz = h_pool.shape[0]
    n_classes, cpad = we_p.shape
    grid_spec = pltpu.PrefetchScalarGridSpec(
        num_scalar_prefetch=1,                  # labels y -> SMEM
        grid=(bsz,),
        in_specs=[
            pl.BlockSpec((1, 1, cpad), lambda b, y_ref: (b, 0, 0)),
            pl.BlockSpec((1, cpad), lambda b, y_ref: (0, 0)),
            pl.BlockSpec((1, 1), lambda b, y_ref: (0, 0)),
            pl.BlockSpec((n_classes, cpad), lambda b, y_ref: (0, 0)),
            pl.BlockSpec((1, cpad), lambda b, y_ref: (0, 0)),
        ],
        out_specs=pl.BlockSpec((1, 1, 1), lambda b, y_ref: (b, 0, 0)),
    )
    out = pl.pallas_call(
        _head_kernel,
        grid_spec=grid_spec,
        out_shape=jax.ShapeDtypeStruct((bsz, 1, 1), jnp.float32),
        compiler_params=pltpu.CompilerParams(
            dimension_semantics=("parallel",),
            vmem_limit_bytes=_vmem_limit_bytes()),
    )(y.astype(jnp.int32), h_pool, wl_p, bl_p, we_p, be_p)
    return out.reshape(-1)


# ----------------------------------------------------------------------------
# Plain-JAX glue: im2col (NHWC), spectral norm, parameter setup
# ----------------------------------------------------------------------------
def im2col_nhwc(x, k=4, stride=2, pad=1):
    # TODO(synk): build the patch block inside the conv kernel from the padded
    # NHWC tile (one DMA per row-tile) instead of materializing the 4x-inflated
    # im2col matrix in HBM.
    b, h, w, c = x.shape
    ho = (h + 2 * pad - k) // stride + 1
    wo = (w + 2 * pad - k) // stride + 1
    xp = jnp.pad(x, ((0, 0), (pad, pad), (pad, pad), (0, 0)))
    cols = []
    for di in range(k):
        for dj in range(k):
            cols.append(xp[:, di:di + stride * ho:stride,
                              dj:dj + stride * wo:stride, :])    # (B,Ho,Wo,C)
    p = jnp.stack(cols, axis=3).reshape(b, ho, wo, k * k * c)    # (kh,kw,cin) ordering
    return p.reshape(b * ho * wo, k * k * c), (b, ho, wo)


def spectral_sigma(w2d, iters=20):
    # TODO(synk): reference SNConv2d/SNLinear use a 1-step power iteration with a
    # persistent `u` buffer; here we use a converged power iteration (exact sigma).
    u = jnp.ones((w2d.shape[0],), jnp.float32)
    v = jnp.ones((w2d.shape[1],), jnp.float32)
    for _ in range(iters):
        v = w2d.T @ u
        v = v / (jnp.linalg.norm(v) + 1e-12)
        u = w2d @ v
        u = u / (jnp.linalg.norm(u) + 1e-12)
    return u @ (w2d @ v)


def _prep_conv_params(w, b, gamma, beta):
    cout, cin, kh, kw = w.shape
    cpad = _round_up(cout, LANE)
    w_bar = w / spectral_sigma(w.reshape(cout, -1))
    w_mat = jnp.transpose(w_bar, (2, 3, 1, 0)).reshape(kh * kw * cin, cout)
    w_mat = _pad_last(w_mat, cpad).astype(jnp.bfloat16)          # bf16 MXU operand
    bias_p = _pad_last(b.reshape(1, cout), cpad).astype(jnp.float32)
    gamma_p = _pad_last(gamma.reshape(1, cout), cpad).astype(jnp.float32)
    beta_p = _pad_last(beta.reshape(1, cout), cpad).astype(jnp.float32)
    return w_mat, bias_p, gamma_p, beta_p, cout, cpad


def conv_bn_lrelu_layer(h_nhwc, layer_params):
    # (B, H, W, Cin) bf16 -> (B, Ho, Wo, Cout) bf16 (NHWC end-to-end, no transposes)
    w, b, gamma, beta = layer_params
    w_mat, bias_p, gamma_p, beta_p, cout, cpad = _prep_conv_params(w, b, gamma, beta)
    patches, (bsz, ho, wo) = im2col_nhwc(h_nhwc)
    z, ssum, ssq, tm = _conv_matmul_stats(patches, w_mat, bias_p, cpad)
    y = _bn_lrelu(z, ssum, ssq, gamma_p, beta_p, tm, out_dtype=jnp.bfloat16)
    return y[:, :cout].reshape(bsz, ho, wo, cout)


def conv_bn_lrelu_pool_layer(h_nhwc, layer_params):
    # Last conv layer: spatial sum-pool fused into the BN/LeakyReLU epilogue,
    # so the (B, S, C3) activation never round-trips through HBM.
    w, b, gamma, beta = layer_params
    w_mat, bias_p, gamma_p, beta_p, cout, cpad = _prep_conv_params(w, b, gamma, beta)
    patches, (bsz, ho, wo) = im2col_nhwc(h_nhwc)
    z, ssum, ssq, _ = _conv_matmul_stats(patches, w_mat, bias_p, cpad)
    z3 = z.reshape(bsz, ho * wo, cpad)                           # free row-major reshape
    pooled = _bn_lrelu_pool(z3, ssum, ssq, gamma_p, beta_p)      # (B, 1, Cpad)
    return pooled, cout, cpad


def init_params(key, nc, ndf, n_classes):
    chans = [nc, ndf, ndf * 2, ndf * 4]
    ki = iter(jax.random.split(key, 16))
    layers = []
    for i in range(3):
        cin, cout = chans[i], chans[i + 1]
        w = 0.1 * jax.random.normal(next(ki), (cout, cin, 4, 4), jnp.float32)
        b = 0.1 * jax.random.normal(next(ki), (cout,), jnp.float32)
        gamma = 1.0 + 0.1 * jax.random.normal(next(ki), (cout,), jnp.float32)
        beta = 0.1 * jax.random.normal(next(ki), (cout,), jnp.float32)
        layers.append((w, b, gamma, beta))
    c3 = ndf * 4
    wl = 0.1 * jax.random.normal(next(ki), (1, c3), jnp.float32)          # SNLinear(C3, 1)
    bl = 0.1 * jax.random.normal(next(ki), (1,), jnp.float32)
    we = 0.1 * jax.random.normal(next(ki), (c3, n_classes), jnp.float32)  # SNLinear(n_classes, C3)
    be = 0.1 * jax.random.normal(next(ki), (c3,), jnp.float32)
    return {"layers": layers, "linear": (wl, bl), "embedding": (we, be)}


def discriminator_forward(params, x, y):
    # x: NCHW (public interface) -> NHWC bf16 once at entry.
    h = jnp.transpose(x, (0, 2, 3, 1)).astype(jnp.bfloat16)
    h = conv_bn_lrelu_layer(h, params["layers"][0])
    h = conv_bn_lrelu_layer(h, params["layers"][1])
    pooled, c3, cpad = conv_bn_lrelu_pool_layer(h, params["layers"][2])   # (B,1,Cpad)

    wl, bl = params["linear"]       # (1, C3), (1,)
    we, be = params["embedding"]    # (C3, n_classes), (C3,)
    wl_p = _pad_last(wl / spectral_sigma(wl), cpad).astype(jnp.float32)           # (1, Cpad)
    we_p = _pad_last((we / spectral_sigma(we)).T, cpad).astype(jnp.float32)       # (n_classes, Cpad)
    be_p = _pad_last(be.reshape(1, c3), cpad).astype(jnp.float32)                 # (1, Cpad)
    bl_p = bl.reshape(1, 1).astype(jnp.float32)
    return _head(pooled, y, wl_p, bl_p, we_p, be_p)                               # (B,)


if __name__ == "__main__":
    key = jax.random.PRNGKey(0)
    B, nc, H, W = 2, 1, 16, 16
    ndf, n_classes = 8, 10
    kx, ky, kp = jax.random.split(key, 3)
    x = jax.random.normal(kx, (B, nc, H, W), jnp.float32)
    y = jax.random.randint(ky, (B,), 0, n_classes)
    params = init_params(kp, nc, ndf, n_classes)

    fwd = jax.jit(discriminator_forward)
    out = jax.block_until_ready(fwd(params, x, y))
    assert out.shape == (B,) and out.dtype == jnp.float32
    assert bool(jnp.all(jnp.isfinite(out)))
    print("KERNEL_OK")
</pallas_src>

<mosaic_0001>
module attributes {stable_mosaic.version = 11 : i64} {
  func.func @_bn_lrelu_kernel(%arg0: i32, %arg1: memref<128x128xf32, #tpu.memory_space<vmem>>, %arg2: memref<1x128xf32, #tpu.memory_space<vmem>>, %arg3: memref<1x128xf32, #tpu.memory_space<vmem>>, %arg4: memref<1x128xf32, #tpu.memory_space<vmem>>, %arg5: memref<1x128xf32, #tpu.memory_space<vmem>>, %arg6: memref<128x128xbf16, #tpu.memory_space<vmem>>) attributes {dimension_semantics = [#tpu.dimension_semantics<parallel>], iteration_bounds = array<i64: 1>, scalar_prefetch = 0 : i64, scratch_operands = 0 : i64, tpu.core_type = #tpu.core_type<tc>, window_params = [{transform_indices = @transform_0, window_bounds = array<i64: 128, 128>}, {pipeline_mode = #tpu.pipeline_mode<synchronous>, transform_indices = @transform_1, window_bounds = array<i64: 1, 128>}, {pipeline_mode = #tpu.pipeline_mode<synchronous>, transform_indices = @transform_2, window_bounds = array<i64: 1, 128>}, {pipeline_mode = #tpu.pipeline_mode<synchronous>, transform_indices = @transform_3, window_bounds = array<i64: 1, 128>}, {pipeline_mode = #tpu.pipeline_mode<synchronous>, transform_indices = @transform_4, window_bounds = array<i64: 1, 128>}, {transform_indices = @transform_5, window_bounds = array<i64: 128, 128>}]} {
    %c0 = arith.constant 0 : index
    %c0_0 = arith.constant 0 : index
    %0 = vector.load %arg2[%c0, %c0_0] : memref<1x128xf32, #tpu.memory_space<vmem>>, vector<1x128xf32>
    %cst = arith.constant 7.812500e-03 : f32
    %1 = vector.broadcast %cst : f32 to vector<1x128xf32>
    %2 = arith.mulf %0, %1 : vector<1x128xf32>
    %c0_1 = arith.constant 0 : index
    %c0_2 = arith.constant 0 : index
    %3 = vector.load %arg3[%c0_1, %c0_2] : memref<1x128xf32, #tpu.memory_space<vmem>>, vector<1x128xf32>
    %cst_3 = arith.constant 7.812500e-03 : f32
    %4 = vector.broadcast %cst_3 : f32 to vector<1x128xf32>
    %5 = arith.mulf %3, %4 : vector<1x128xf32>
    %6 = arith.mulf %2, %2 : vector<1x128xf32>
    %7 = arith.subf %5, %6 : vector<1x128xf32>
    %cst_4 = arith.constant 0.000000e+00 : f32
    %8 = vector.broadcast %cst_4 : f32 to vector<1x128xf32>
    %9 = arith.maximumf %7, %8 : vector<1x128xf32>
    %c0_5 = arith.constant 0 : index
    %c0_6 = arith.constant 0 : index
    %10 = vector.load %arg1[%c0_5, %c0_6] : memref<128x128xf32, #tpu.memory_space<vmem>>, vector<128x128xf32>
    %11 = vector.broadcast %2 : vector<1x128xf32> to vector<128x128xf32>
    %12 = arith.subf %10, %11 : vector<128x128xf32>
    %cst_7 = arith.constant 9.99999974E-6 : f32
    %13 = vector.broadcast %cst_7 : f32 to vector<1x128xf32>
    %14 = arith.addf %9, %13 : vector<1x128xf32>
    %15 = math.rsqrt %14 : vector<1x128xf32>
    %16 = vector.broadcast %15 : vector<1x128xf32> to vector<128x128xf32>
    %17 = arith.mulf %12, %16 : vector<128x128xf32>
    %c0_8 = arith.constant 0 : index
    %c0_9 = arith.constant 0 : index
    %18 = vector.load %arg4[%c0_8, %c0_9] : memref<1x128xf32, #tpu.memory_space<vmem>>, vector<1x128xf32>
    %19 = vector.broadcast %18 : vector<1x128xf32> to vector<128x128xf32>
    %20 = arith.mulf %19, %17 : vector<128x128xf32>
    %c0_10 = arith.constant 0 : index
    %c0_11 = arith.constant 0 : index
    %21 = vector.load %arg5[%c0_10, %c0_11] : memref<1x128xf32, #tpu.memory_space<vmem>>, vector<1x128xf32>
    %22 = vector.broadcast %21 : vector<1x128xf32> to vector<128x128xf32>
    %23 = arith.addf %20, %22 : vector<128x128xf32>
    %cst_12 = arith.constant 0.000000e+00 : f32
    %24 = vector.broadcast %cst_12 : f32 to vector<128x128xf32>
    %25 = arith.cmpf ogt, %23, %24 : vector<128x128xf32>
    %cst_13 = arith.constant 2.000000e-01 : f32
    %26 = vector.broadcast %cst_13 : f32 to vector<128x128xf32>
    %27 = arith.mulf %26, %23 : vector<128x128xf32>
    %28 = arith.select %25, %23, %27 : vector<128x128xi1>, vector<128x128xf32>
    %29 = arith.truncf %28 : vector<128x128xf32> to vector<128x128xbf16>
    %c0_14 = arith.constant 0 : index
    %c0_15 = arith.constant 0 : index
    %30 = vector.load %arg6[%c0_14, %c0_15] : memref<128x128xbf16, #tpu.memory_space<vmem>>, vector<128x128xbf16>
    tpu.vector_store %arg6[%c0_14, %c0_15], %29 {strides = array<i32>} : memref<128x128xbf16, #tpu.memory_space<vmem>>, vector<128x128xbf16>,
    return
  }
  func.func @transform_0(%arg0: i32) -> (i32, i32) {
    %c0_i32 = arith.constant 0 : i32
    %c0_i32_0 = arith.constant 0 : i32
    return %arg0, %c0_i32 : i32, i32
  }
  func.func @transform_1(%arg0: i32) -> (i32, i32) {
    %c0_i32 = arith.constant 0 : i32
    %c0_i32_0 = arith.constant 0 : i32
    %c0_i32_1 = arith.constant 0 : i32
    return %c0_i32, %c0_i32_0 : i32, i32
  }
  func.func @transform_2(%arg0: i32) -> (i32, i32) {
    %c0_i32 = arith.constant 0 : i32
    %c0_i32_0 = arith.constant 0 : i32
    %c0_i32_1 = arith.constant 0 : i32
    return %c0_i32, %c0_i32_0 : i32, i32
  }
  func.func @transform_3(%arg0: i32) -> (i32, i32) {
    %c0_i32 = arith.constant 0 : i32
    %c0_i32_0 = arith.constant 0 : i32
    %c0_i32_1 = arith.constant 0 : i32
    return %c0_i32, %c0_i32_0 : i32, i32
  }
  func.func @transform_4(%arg0: i32) -> (i32, i32) {
    %c0_i32 = arith.constant 0 : i32
    %c0_i32_0 = arith.constant 0 : i32
    %c0_i32_1 = arith.constant 0 : i32
    return %c0_i32, %c0_i32_0 : i32, i32
  }
  func.func @transform_5(%arg0: i32) -> (i32, i32) {
    %c0_i32 = arith.constant 0 : i32
    %c0_i32_0 = arith.constant 0 : i32
    return %arg0, %c0_i32 : i32, i32
  }
}

module attributes {stable_mosaic.version = 11 : i64} {
  func.func @_matmul_stats_kernel(%arg0: i32, %arg1: memref<128x16xbf16, #tpu.memory_space<vmem>>, %arg2: memref<16x128xbf16, #tpu.memory_space<vmem>>, %arg3: memref<1x128xf32, #tpu.memory_space<vmem>>, %arg4: memref<128x128xf32, #tpu.memory_space<vmem>>, %arg5: memref<1x128xf32, #tpu.memory_space<vmem>>, %arg6: memref<1x128xf32, #tpu.memory_space<vmem>>) attributes {dimension_semantics = [#tpu.dimension_semantics<arbitrary>], iteration_bounds = array<i64: 1>, scalar_prefetch = 0 : i64, scratch_operands = 0 : i64, tpu.core_type = #tpu.core_type<tc>, window_params = [{transform_indices = @transform_0, window_bounds = array<i64: 128, 16>}, {pipeline_mode = #tpu.pipeline_mode<synchronous>, transform_indices = @transform_1, window_bounds = array<i64: 16, 128>}, {pipeline_mode = #tpu.pipeline_mode<synchronous>, transform_indices = @transform_2, window_bounds = array<i64: 1, 128>}, {transform_indices = @transform_3, window_bounds = array<i64: 128, 128>}, {pipeline_mode = #tpu.pipeline_mode<synchronous>, transform_indices = @transform_4, window_bounds = array<i64: 1, 128>}, {pipeline_mode = #tpu.pipeline_mode<synchronous>, transform_indices = @transform_5, window_bounds = array<i64: 1, 128>}]} {
    %c0 = arith.constant 0 : index
    %c0_0 = arith.constant 0 : index
    %0 = vector.load %arg1[%c0, %c0_0] : memref<128x16xbf16, #tpu.memory_space<vmem>>, vector<128x16xbf16>
    %c0_1 = arith.constant 0 : index
    %c0_2 = arith.constant 0 : index
    %1 = vector.load %arg2[%c0_1, %c0_2] : memref<16x128xbf16, #tpu.memory_space<vmem>>, vector<16x128xbf16>
    %cst = arith.constant dense<0.000000e+00> : vector<128x128xf32>
    %2 = tpu.matmul %0, %1, %cst {dimension_numbers = #tpu.dot_dimension_numbers<[1], [0], [0], [1], [0, 0, 1, 1], [], []>} : vector<128x16xbf16>, vector<16x128xbf16>, vector<128x128xf32> -> vector<128x128xf32>
    %c0_3 = arith.constant 0 : index
    %c0_4 = arith.constant 0 : index
    %3 = vector.load %arg3[%c0_3, %c0_4] : memref<1x128xf32, #tpu.memory_space<vmem>>, vector<1x128xf32>
    %4 = vector.broadcast %3 : vector<1x128xf32> to vector<128x128xf32>
    %5 = arith.addf %2, %4 : vector<128x128xf32>
    %c0_5 = arith.constant 0 : index
    %c0_6 = arith.constant 0 : index
    %6 = vector.load %arg4[%c0_5, %c0_6] : memref<128x128xf32, #tpu.memory_space<vmem>>, vector<128x128xf32>
    tpu.vector_store %arg4[%c0_5, %c0_6], %5 {strides = array<i32>} : memref<128x128xf32, #tpu.memory_space<vmem>>, vector<128x128xf32>,
    %c0_i32 = arith.constant 0 : i32
    %7 = arith.cmpi eq, %arg0, %c0_i32 : i32
    %8 = arith.extui %7 : i1 to i32
    %c0_i32_7 = arith.constant 0 : i32
    %9 = arith.cmpi ne, %8, %c0_i32_7 : i32
    scf.if %9 {
      %cst_18 = arith.constant 0.000000e+00 : f32
      %21 = vector.broadcast %cst_18 : f32 to vector<1x128xf32>
      %c0_19 = arith.constant 0 : index
      %c0_20 = arith.constant 0 : index
      %22 = vector.load %arg5[%c0_19, %c0_20] : memref<1x128xf32, #tpu.memory_space<vmem>>, vector<1x128xf32>
      tpu.vector_store %arg5[%c0_19, %c0_20], %21 {strides = array<i32>} : memref<1x128xf32, #tpu.memory_space<vmem>>, vector<1x128xf32>,
      %cst_21 = arith.constant 0.000000e+00 : f32
      %23 = vector.broadcast %cst_21 : f32 to vector<1x128xf32>
      %c0_22 = arith.constant 0 : index
      %c0_23 = arith.constant 0 : index
      %24 = vector.load %arg6[%c0_22, %c0_23] : memref<1x128xf32, #tpu.memory_space<vmem>>, vector<1x128xf32>
      tpu.vector_store %arg6[%c0_22, %c0_23], %23 {strides = array<i32>} : memref<1x128xf32, #tpu.memory_space<vmem>>, vector<1x128xf32>,
    } else {
    }
    %c0_8 = arith.constant 0 : index
    %c0_9 = arith.constant 0 : index
    %10 = vector.load %arg5[%c0_8, %c0_9] : memref<1x128xf32, #tpu.memory_space<vmem>>, vector<1x128xf32>
    %cst_10 = arith.constant dense<0.000000e+00> : vector<128xf32>
    %11 = vector.multi_reduction <add>, %5, %cst_10 [0] : vector<128x128xf32> to vector<128xf32>
    %12 = vector.shape_cast %11 : vector<128xf32> to vector<1x128xf32>
    %13 = arith.addf %10, %12 : vector<1x128xf32>
    %c0_11 = arith.constant 0 : index
    %c0_12 = arith.constant 0 : index
    %14 = vector.load %arg5[%c0_11, %c0_12] : memref<1x128xf32, #tpu.memory_space<vmem>>, vector<1x128xf32>
    tpu.vector_store %arg5[%c0_11, %c0_12], %13 {strides = array<i32>} : memref<1x128xf32, #tpu.memory_space<vmem>>, vector<1x128xf32>,
    %c0_13 = arith.constant 0 : index
    %c0_14 = arith.constant 0 : index
    %15 = vector.load %arg6[%c0_13, %c0_14] : memref<1x128xf32, #tpu.memory_space<vmem>>, vector<1x128xf32>
    %16 = arith.mulf %5, %5 : vector<128x128xf32>
    %cst_15 = arith.constant dense<0.000000e+00> : vector<128xf32>
    %17 = vector.multi_reduction <add>, %16, %cst_15 [0] : vector<128x128xf32> to vector<128xf32>
    %18 = vector.shape_cast %17 : vector<128xf32> to vector<1x128xf32>
    %19 = arith.addf %15, %18 : vector<1x128xf32>
    %c0_16 = arith.constant 0 : index
    %c0_17 = arith.constant 0 : index
    %20 = vector.load %arg6[%c0_16, %c0_17] : memref<1x128xf32, #tpu.memory_space<vmem>>, vector<1x128xf32>
    tpu.vector_store %arg6[%c0_16, %c0_17], %19 {strides = array<i32>} : memref<1x128xf32, #tpu.memory_space<vmem>>, vector<1x128xf32>,
    return
  }
  func.func @transform_0(%arg0: i32) -> (i32, i32) {
    %c0_i32 = arith.constant 0 : i32
    %c0_i32_0 = arith.constant 0 : i32
    return %arg0, %c0_i32 : i32, i32
  }
  func.func @transform_1(%arg0: i32) -> (i32, i32) {
    %c0_i32 = arith.constant 0 : i32
    %c0_i32_0 = arith.constant 0 : i32
    %c0_i32_1 = arith.constant 0 : i32
    return %c0_i32, %c0_i32_0 : i32, i32
  }
  func.func @transform_2(%arg0: i32) -> (i32, i32) {
    %c0_i32 = arith.constant 0 : i32
    %c0_i32_0 = arith.constant 0 : i32
    %c0_i32_1 = arith.constant 0 : i32
    return %c0_i32, %c0_i32_0 : i32, i32
  }
  func.func @transform_3(%arg0: i32) -> (i32, i32) {
    %c0_i32 = arith.constant 0 : i32
    %c0_i32_0 = arith.constant 0 : i32
    return %arg0, %c0_i32 : i32, i32
  }
  func.func @transform_4(%arg0: i32) -> (i32, i32) {
    %c0_i32 = arith.constant 0 : i32
    %c0_i32_0 = arith.constant 0 : i32
    %c0_i32_1 = arith.constant 0 : i32
    return %c0_i32, %c0_i32_0 : i32, i32
  }
  func.func @transform_5(%arg0: i32) -> (i32, i32) {
    %c0_i32 = arith.constant 0 : i32
    %c0_i32_0 = arith.constant 0 : i32
    %c0_i32_1 = arith.constant 0 : i32
    return %c0_i32, %c0_i32_0 : i32, i32
  }
}

module attributes {stable_mosaic.version = 11 : i64} {
  func.func @_matmul_stats_kernel(%arg0: i32, %arg1: memref<32x128xbf16, #tpu.memory_space<vmem>>, %arg2: memref<128x128xbf16, #tpu.memory_space<vmem>>, %arg3: memref<1x128xf32, #tpu.memory_space<vmem>>, %arg4: memref<32x128xf32, #tpu.memory_space<vmem>>, %arg5: memref<1x128xf32, #tpu.memory_space<vmem>>, %arg6: memref<1x128xf32, #tpu.memory_space<vmem>>) attributes {dimension_semantics = [#tpu.dimension_semantics<arbitrary>], iteration_bounds = array<i64: 1>, scalar_prefetch = 0 : i64, scratch_operands = 0 : i64, tpu.core_type = #tpu.core_type<tc>, window_params = [{transform_indices = @transform_0, window_bounds = array<i64: 32, 128>}, {pipeline_mode = #tpu.pipeline_mode<synchronous>, transform_indices = @transform_1, window_bounds = array<i64: 128, 128>}, {pipeline_mode = #tpu.pipeline_mode<synchronous>, transform_indices = @transform_2, window_bounds = array<i64: 1, 128>}, {transform_indices = @transform_3, window_bounds = array<i64: 32, 128>}, {pipeline_mode = #tpu.pipeline_mode<synchronous>, transform_indices = @transform_4, window_bounds = array<i64: 1, 128>}, {pipeline_mode = #tpu.pipeline_mode<synchronous>, transform_indices = @transform_5, window_bounds = array<i64: 1, 128>}]} {
    %c0 = arith.constant 0 : index
    %c0_0 = arith.constant 0 : index
    %0 = vector.load %arg1[%c0, %c0_0] : memref<32x128xbf16, #tpu.memory_space<vmem>>, vector<32x128xbf16>
    %c0_1 = arith.constant 0 : index
    %c0_2 = arith.constant 0 : index
    %1 = vector.load %arg2[%c0_1, %c0_2] : memref<128x128xbf16, #tpu.memory_space<vmem>>, vector<128x128xbf16>
    %cst = arith.constant dense<0.000000e+00> : vector<32x128xf32>
    %2 = tpu.matmul %0, %1, %cst {dimension_numbers = #tpu.dot_dimension_numbers<[1], [0], [0], [1], [0, 0, 1, 1], [], []>} : vector<32x128xbf16>, vector<128x128xbf16>, vector<32x128xf32> -> vector<32x128xf32>
    %c0_3 = arith.constant 0 : index
    %c0_4 = arith.constant 0 : index
    %3 = vector.load %arg3[%c0_3, %c0_4] : memref<1x128xf32, #tpu.memory_space<vmem>>, vector<1x128xf32>
    %4 = vector.broadcast %3 : vector<1x128xf32> to vector<32x128xf32>
    %5 = arith.addf %2, %4 : vector<32x128xf32>
    %c0_5 = arith.constant 0 : index
    %c0_6 = arith.constant 0 : index
    %6 = vector.load %arg4[%c0_5, %c0_6] : memref<32x128xf32, #tpu.memory_space<vmem>>, vector<32x128xf32>
    tpu.vector_store %arg4[%c0_5, %c0_6], %5 {strides = array<i32>} : memref<32x128xf32, #tpu.memory_space<vmem>>, vector<32x128xf32>,
    %c0_i32 = arith.constant 0 : i32
    %7 = arith.cmpi eq, %arg0, %c0_i32 : i32
    %8 = arith.extui %7 : i1 to i32
    %c0_i32_7 = arith.constant 0 : i32
    %9 = arith.cmpi ne, %8, %c0_i32_7 : i32
    scf.if %9 {
      %cst_18 = arith.constant 0.000000e+00 : f32
      %21 = vector.broadcast %cst_18 : f32 to vector<1x128xf32>
      %c0_19 = arith.constant 0 : index
      %c0_20 = arith.constant 0 : index
      %22 = vector.load %arg5[%c0_19, %c0_20] : memref<1x128xf32, #tpu.memory_space<vmem>>, vector<1x128xf32>
      tpu.vector_store %arg5[%c0_19, %c0_20], %21 {strides = array<i32>} : memref<1x128xf32, #tpu.memory_space<vmem>>, vector<1x128xf32>,
      %cst_21 = arith.constant 0.000000e+00 : f32
      %23 = vector.broadcast %cst_21 : f32 to vector<1x128xf32>
      %c0_22 = arith.constant 0 : index
      %c0_23 = arith.constant 0 : index
      %24 = vector.load %arg6[%c0_22, %c0_23] : memref<1x128xf32, #tpu.memory_space<vmem>>, vector<1x128xf32>
      tpu.vector_store %arg6[%c0_22, %c0_23], %23 {strides = array<i32>} : memref<1x128xf32, #tpu.memory_space<vmem>>, vector<1x128xf32>,
    } else {
    }
    %c0_8 = arith.constant 0 : index
    %c0_9 = arith.constant 0 : index
    %10 = vector.load %arg5[%c0_8, %c0_9] : memref<1x128xf32, #tpu.memory_space<vmem>>, vector<1x128xf32>
    %cst_10 = arith.constant dense<0.000000e+00> : vector<128xf32>
    %11 = vector.multi_reduction <add>, %5, %cst_10 [0] : vector<32x128xf32> to vector<128xf32>
    %12 = vector.shape_cast %11 : vector<128xf32> to vector<1x128xf32>
    %13 = arith.addf %10, %12 : vector<1x128xf32>
    %c0_11 = arith.constant 0 : index
    %c0_12 = arith.constant 0 : index
    %14 = vector.load %arg5[%c0_11, %c0_12] : memref<1x128xf32, #tpu.memory_space<vmem>>, vector<1x128xf32>
    tpu.vector_store %arg5[%c0_11, %c0_12], %13 {strides = array<i32>} : memref<1x128xf32, #tpu.memory_space<vmem>>, vector<1x128xf32>,
    %c0_13 = arith.constant 0 : index
    %c0_14 = arith.constant 0 : index
    %15 = vector.load %arg6[%c0_13, %c0_14] : memref<1x128xf32, #tpu.memory_space<vmem>>, vector<1x128xf32>
    %16 = arith.mulf %5, %5 : vector<32x128xf32>
    %cst_15 = arith.constant dense<0.000000e+00> : vector<128xf32>
    %17 = vector.multi_reduction <add>, %16, %cst_15 [0] : vector<32x128xf32> to vector<128xf32>
    %18 = vector.shape_cast %17 : vector<128xf32> to vector<1x128xf32>
    %19 = arith.addf %15, %18 : vector<1x128xf32>
    %c0_16 = arith.constant 0 : index
    %c0_17 = arith.constant 0 : index
    %20 = vector.load %arg6[%c0_16, %c0_17] : memref<1x128xf32, #tpu.memory_space<vmem>>, vector<1x128xf32>
    tpu.vector_store %arg6[%c0_16, %c0_17], %19 {strides = array<i32>} : memref<1x128xf32, #tpu.memory_space<vmem>>, vector<1x128xf32>,
    return
  }
  func.func @transform_0(%arg0: i32) -> (i32, i32) {
    %c0_i32 = arith.constant 0 : i32
    %c0_i32_0 = arith.constant 0 : i32
    return %arg0, %c0_i32 : i32, i32
  }
  func.func @transform_1(%arg0: i32) -> (i32, i32) {
    %c0_i32 = arith.constant 0 : i32
    %c0_i32_0 = arith.constant 0 : i32
    %c0_i32_1 = arith.constant 0 : i32
    return %c0_i32, %c0_i32_0 : i32, i32
  }
  func.func @transform_2(%arg0: i32) -> (i32, i32) {
    %c0_i32 = arith.constant 0 : i32
    %c0_i32_0 = arith.constant 0 : i32
    %c0_i32_1 = arith.constant 0 : i32
    return %c0_i32, %c0_i32_0 : i32, i32
  }
  func.func @transform_3(%arg0: i32) -> (i32, i32) {
    %c0_i32 = arith.constant 0 : i32
    %c0_i32_0 = arith.constant 0 : i32
    return %arg0, %c0_i32 : i32, i32
  }
  func.func @transform_4(%arg0: i32) -> (i32, i32) {
    %c0_i32 = arith.constant 0 : i32
    %c0_i32_0 = arith.constant 0 : i32
    %c0_i32_1 = arith.constant 0 : i32
    return %c0_i32, %c0_i32_0 : i32, i32
  }
  func.func @transform_5(%arg0: i32) -> (i32, i32) {
    %c0_i32 = arith.constant 0 : i32
    %c0_i32_0 = arith.constant 0 : i32
    %c0_i32_1 = arith.constant 0 : i32
    return %c0_i32, %c0_i32_0 : i32, i32
  }
}

module attributes {stable_mosaic.version = 11 : i64} {
  func.func @_bn_lrelu_kernel(%arg0: i32, %arg1: memref<32x128xf32, #tpu.memory_space<vmem>>, %arg2: memref<1x128xf32, #tpu.memory_space<vmem>>, %arg3: memref<1x128xf32, #tpu.memory_space<vmem>>, %arg4: memref<1x128xf32, #tpu.memory_space<vmem>>, %arg5: memref<1x128xf32, #tpu.memory_space<vmem>>, %arg6: memref<32x128xbf16, #tpu.memory_space<vmem>>) attributes {dimension_semantics = [#tpu.dimension_semantics<parallel>], iteration_bounds = array<i64: 1>, scalar_prefetch = 0 : i64, scratch_operands = 0 : i64, tpu.core_type = #tpu.core_type<tc>, window_params = [{transform_indices = @transform_0, window_bounds = array<i64: 32, 128>}, {pipeline_mode = #tpu.pipeline_mode<synchronous>, transform_indices = @transform_1, window_bounds = array<i64: 1, 128>}, {pipeline_mode = #tpu.pipeline_mode<synchronous>, transform_indices = @transform_2, window_bounds = array<i64: 1, 128>}, {pipeline_mode = #tpu.pipeline_mode<synchronous>, transform_indices = @transform_3, window_bounds = array<i64: 1, 128>}, {pipeline_mode = #tpu.pipeline_mode<synchronous>, transform_indices = @transform_4, window_bounds = array<i64: 1, 128>}, {transform_indices = @transform_5, window_bounds = array<i64: 32, 128>}]} {
    %c0 = arith.constant 0 : index
    %c0_0 = arith.constant 0 : index
    %0 = vector.load %arg2[%c0, %c0_0] : memref<1x128xf32, #tpu.memory_space<vmem>>, vector<1x128xf32>
    %cst = arith.constant 3.125000e-02 : f32
    %1 = vector.broadcast %cst : f32 to vector<1x128xf32>
    %2 = arith.mulf %0, %1 : vector<1x128xf32>
    %c0_1 = arith.constant 0 : index
    %c0_2 = arith.constant 0 : index
    %3 = vector.load %arg3[%c0_1, %c0_2] : memref<1x128xf32, #tpu.memory_space<vmem>>, vector<1x128xf32>
    %cst_3 = arith.constant 3.125000e-02 : f32
    %4 = vector.broadcast %cst_3 : f32 to vector<1x128xf32>
    %5 = arith.mulf %3, %4 : vector<1x128xf32>
    %6 = arith.mulf %2, %2 : vector<1x128xf32>
    %7 = arith.subf %5, %6 : vector<1x128xf32>
    %cst_4 = arith.constant 0.000000e+00 : f32
    %8 = vector.broadcast %cst_4 : f32 to vector<1x128xf32>
    %9 = arith.maximumf %7, %8 : vector<1x128xf32>
    %c0_5 = arith.constant 0 : index
    %c0_6 = arith.constant 0 : index
    %10 = vector.load %arg1[%c0_5, %c0_6] : memref<32x128xf32, #tpu.memory_space<vmem>>, vector<32x128xf32>
    %11 = vector.broadcast %2 : vector<1x128xf32> to vector<32x128xf32>
    %12 = arith.subf %10, %11 : vector<32x128xf32>
    %cst_7 = arith.constant 9.99999974E-6 : f32
    %13 = vector.broadcast %cst_7 : f32 to vector<1x128xf32>
    %14 = arith.addf %9, %13 : vector<1x128xf32>
    %15 = math.rsqrt %14 : vector<1x128xf32>
    %16 = vector.broadcast %15 : vector<1x128xf32> to vector<32x128xf32>
    %17 = arith.mulf %12, %16 : vector<32x128xf32>
    %c0_8 = arith.constant 0 : index
    %c0_9 = arith.constant 0 : index
    %18 = vector.load %arg4[%c0_8, %c0_9] : memref<1x128xf32, #tpu.memory_space<vmem>>, vector<1x128xf32>
    %19 = vector.broadcast %18 : vector<1x128xf32> to vector<32x128xf32>
    %20 = arith.mulf %19, %17 : vector<32x128xf32>
    %c0_10 = arith.constant 0 : index
    %c0_11 = arith.constant 0 : index
    %21 = vector.load %arg5[%c0_10, %c0_11] : memref<1x128xf32, #tpu.memory_space<vmem>>, vector<1x128xf32>
    %22 = vector.broadcast %21 : vector<1x128xf32> to vector<32x128xf32>
    %23 = arith.addf %20, %22 : vector<32x128xf32>
    %cst_12 = arith.constant 0.000000e+00 : f32
    %24 = vector.broadcast %cst_12 : f32 to vector<32x128xf32>
    %25 = arith.cmpf ogt, %23, %24 : vector<32x128xf32>
    %cst_13 = arith.constant 2.000000e-01 : f32
    %26 = vector.broadcast %cst_13 : f32 to vector<32x128xf32>
    %27 = arith.mulf %26, %23 : vector<32x128xf32>
    %28 = arith.select %25, %23, %27 : vector<32x128xi1>, vector<32x128xf32>
    %29 = arith.truncf %28 : vector<32x128xf32> to vector<32x128xbf16>
    %c0_14 = arith.constant 0 : index
    %c0_15 = arith.constant 0 : index
    %30 = vector.load %arg6[%c0_14, %c0_15] : memref<32x128xbf16, #tpu.memory_space<vmem>>, vector<32x128xbf16>
    tpu.vector_store %arg6[%c0_14, %c0_15], %29 {strides = array<i32>} : memref<32x128xbf16, #tpu.memory_space<vmem>>, vector<32x128xbf16>,
    return
  }
  func.func @transform_0(%arg0: i32) -> (i32, i32) {
    %c0_i32 = arith.constant 0 : i32
    %c0_i32_0 = arith.constant 0 : i32
    return %arg0, %c0_i32 : i32, i32
  }
  func.func @transform_1(%arg0: i32) -> (i32, i32) {
    %c0_i32 = arith.constant 0 : i32
    %c0_i32_0 = arith.constant 0 : i32
    %c0_i32_1 = arith.constant 0 : i32
    return %c0_i32, %c0_i32_0 : i32, i32
  }
  func.func @transform_2(%arg0: i32) -> (i32, i32) {
    %c0_i32 = arith.constant 0 : i32
    %c0_i32_0 = arith.constant 0 : i32
    %c0_i32_1 = arith.constant 0 : i32
    return %c0_i32, %c0_i32_0 : i32, i32
  }
  func.func @transform_3(%arg0: i32) -> (i32, i32) {
    %c0_i32 = arith.constant 0 : i32
    %c0_i32_0 = arith.constant 0 : i32
    %c0_i32_1 = arith.constant 0 : i32
    return %c0_i32, %c0_i32_0 : i32, i32
  }
  func.func @transform_4(%arg0: i32) -> (i32, i32) {
    %c0_i32 = arith.constant 0 : i32
    %c0_i32_0 = arith.constant 0 : i32
    %c0_i32_1 = arith.constant 0 : i32
    return %c0_i32, %c0_i32_0 : i32, i32
  }
  func.func @transform_5(%arg0: i32) -> (i32, i32) {
    %c0_i32 = arith.constant 0 : i32
    %c0_i32_0 = arith.constant 0 : i32
    return %arg0, %c0_i32 : i32, i32
  }
}

module attributes {stable_mosaic.version = 11 : i64} {
  func.func @_matmul_stats_kernel(%arg0: i32, %arg1: memref<8x256xbf16, #tpu.memory_space<vmem>>, %arg2: memref<256x128xbf16, #tpu.memory_space<vmem>>, %arg3: memref<1x128xf32, #tpu.memory_space<vmem>>, %arg4: memref<8x128xf32, #tpu.memory_space<vmem>>, %arg5: memref<1x128xf32, #tpu.memory_space<vmem>>, %arg6: memref<1x128xf32, #tpu.memory_space<vmem>>) attributes {dimension_semantics = [#tpu.dimension_semantics<arbitrary>], iteration_bounds = array<i64: 1>, scalar_prefetch = 0 : i64, scratch_operands = 0 : i64, tpu.core_type = #tpu.core_type<tc>, window_params = [{transform_indices = @transform_0, window_bounds = array<i64: 8, 256>}, {pipeline_mode = #tpu.pipeline_mode<synchronous>, transform_indices = @transform_1, window_bounds = array<i64: 256, 128>}, {pipeline_mode = #tpu.pipeline_mode<synchronous>, transform_indices = @transform_2, window_bounds = array<i64: 1, 128>}, {transform_indices = @transform_3, window_bounds = array<i64: 8, 128>}, {pipeline_mode = #tpu.pipeline_mode<synchronous>, transform_indices = @transform_4, window_bounds = array<i64: 1, 128>}, {pipeline_mode = #tpu.pipeline_mode<synchronous>, transform_indices = @transform_5, window_bounds = array<i64: 1, 128>}]} {
    %c0 = arith.constant 0 : index
    %c0_0 = arith.constant 0 : index
    %0 = vector.load %arg1[%c0, %c0_0] : memref<8x256xbf16, #tpu.memory_space<vmem>>, vector<8x256xbf16>
    %c0_1 = arith.constant 0 : index
    %c0_2 = arith.constant 0 : index
    %1 = vector.load %arg2[%c0_1, %c0_2] : memref<256x128xbf16, #tpu.memory_space<vmem>>, vector<256x128xbf16>
    %cst = arith.constant dense<0.000000e+00> : vector<8x128xf32>
    %2 = tpu.matmul %0, %1, %cst {dimension_numbers = #tpu.dot_dimension_numbers<[1], [0], [0], [1], [0, 0, 1, 1], [], []>} : vector<8x256xbf16>, vector<256x128xbf16>, vector<8x128xf32> -> vector<8x128xf32>
    %c0_3 = arith.constant 0 : index
    %c0_4 = arith.constant 0 : index
    %3 = vector.load %arg3[%c0_3, %c0_4] : memref<1x128xf32, #tpu.memory_space<vmem>>, vector<1x128xf32>
    %4 = vector.broadcast %3 : vector<1x128xf32> to vector<8x128xf32>
    %5 = arith.addf %2, %4 : vector<8x128xf32>
    %c0_5 = arith.constant 0 : index
    %c0_6 = arith.constant 0 : index
    %6 = vector.load %arg4[%c0_5, %c0_6] : memref<8x128xf32, #tpu.memory_space<vmem>>, vector<8x128xf32>
    tpu.vector_store %arg4[%c0_5, %c0_6], %5 {strides = array<i32>} : memref<8x128xf32, #tpu.memory_space<vmem>>, vector<8x128xf32>,
    %c0_i32 = arith.constant 0 : i32
    %7 = arith.cmpi eq, %arg0, %c0_i32 : i32
    %8 = arith.extui %7 : i1 to i32
    %c0_i32_7 = arith.constant 0 : i32
    %9 = arith.cmpi ne, %8, %c0_i32_7 : i32
    scf.if %9 {
      %cst_18 = arith.constant 0.000000e+00 : f32
      %21 = vector.broadcast %cst_18 : f32 to vector<1x128xf32>
      %c0_19 = arith.constant 0 : index
      %c0_20 = arith.constant 0 : index
      %22 = vector.load %arg5[%c0_19, %c0_20] : memref<1x128xf32, #tpu.memory_space<vmem>>, vector<1x128xf32>
      tpu.vector_store %arg5[%c0_19, %c0_20], %21 {strides = array<i32>} : memref<1x128xf32, #tpu.memory_space<vmem>>, vector<1x128xf32>,
      %cst_21 = arith.constant 0.000000e+00 : f32
      %23 = vector.broadcast %cst_21 : f32 to vector<1x128xf32>
      %c0_22 = arith.constant 0 : index
      %c0_23 = arith.constant 0 : index
      %24 = vector.load %arg6[%c0_22, %c0_23] : memref<1x128xf32, #tpu.memory_space<vmem>>, vector<1x128xf32>
      tpu.vector_store %arg6[%c0_22, %c0_23], %23 {strides = array<i32>} : memref<1x128xf32, #tpu.memory_space<vmem>>, vector<1x128xf32>,
    } else {
    }
    %c0_8 = arith.constant 0 : index
    %c0_9 = arith.constant 0 : index
    %10 = vector.load %arg5[%c0_8, %c0_9] : memref<1x128xf32, #tpu.memory_space<vmem>>, vector<1x128xf32>
    %cst_10 = arith.constant dense<0.000000e+00> : vector<128xf32>
    %11 = vector.multi_reduction <add>, %5, %cst_10 [0] : vector<8x128xf32> to vector<128xf32>
    %12 = vector.shape_cast %11 : vector<128xf32> to vector<1x128xf32>
    %13 = arith.addf %10, %12 : vector<1x128xf32>
    %c0_11 = arith.constant 0 : index
    %c0_12 = arith.constant 0 : index
    %14 = vector.load %arg5[%c0_11, %c0_12] : memref<1x128xf32, #tpu.memory_space<vmem>>, vector<1x128xf32>
    tpu.vector_store %arg5[%c0_11, %c0_12], %13 {strides = array<i32>} : memref<1x128xf32, #tpu.memory_space<vmem>>, vector<1x128xf32>,
    %c0_13 = arith.constant 0 : index
    %c0_14 = arith.constant 0 : index
    %15 = vector.load %arg6[%c0_13, %c0_14] : memref<1x128xf32, #tpu.memory_space<vmem>>, vector<1x128xf32>
    %16 = arith.mulf %5, %5 : vector<8x128xf32>
    %cst_15 = arith.constant dense<0.000000e+00> : vector<128xf32>
    %17 = vector.multi_reduction <add>, %16, %cst_15 [0] : vector<8x128xf32> to vector<128xf32>
    %18 = vector.shape_cast %17 : vector<128xf32> to vector<1x128xf32>
    %19 = arith.addf %15, %18 : vector<1x128xf32>
    %c0_16 = arith.constant 0 : index
    %c0_17 = arith.constant 0 : index
    %20 = vector.load %arg6[%c0_16, %c0_17] : memref<1x128xf32, #tpu.memory_space<vmem>>, vector<1x128xf32>
    tpu.vector_store %arg6[%c0_16, %c0_17], %19 {strides = array<i32>} : memref<1x128xf32, #tpu.memory_space<vmem>>, vector<1x128xf32>,
    return
  }
  func.func @transform_0(%arg0: i32) -> (i32, i32) {
    %c0_i32 = arith.constant 0 : i32
    %c0_i32_0 = arith.constant 0 : i32
    return %arg0, %c0_i32 : i32, i32
  }
  func.func @transform_1(%arg0: i32) -> (i32, i32) {
    %c0_i32 = arith.constant 0 : i32
    %c0_i32_0 = arith.constant 0 : i32
    %c0_i32_1 = arith.constant 0 : i32
    return %c0_i32, %c0_i32_0 : i32, i32
  }
  func.func @transform_2(%arg0: i32) -> (i32, i32) {
    %c0_i32 = arith.constant 0 : i32
    %c0_i32_0 = arith.constant 0 : i32
    %c0_i32_1 = arith.constant 0 : i32
    return %c0_i32, %c0_i32_0 : i32, i32
  }
  func.func @transform_3(%arg0: i32) -> (i32, i32) {
    %c0_i32 = arith.constant 0 : i32
    %c0_i32_0 = arith.constant 0 : i32
    return %arg0, %c0_i32 : i32, i32
  }
  func.func @transform_4(%arg0: i32) -> (i32, i32) {
    %c0_i32 = arith.constant 0 : i32
    %c0_i32_0 = arith.constant 0 : i32
    %c0_i32_1 = arith.constant 0 : i32
    return %c0_i32, %c0_i32_0 : i32, i32
  }
  func.func @transform_5(%arg0: i32) -> (i32, i32) {
    %c0_i32 = arith.constant 0 : i32
    %c0_i32_0 = arith.constant 0 : i32
    %c0_i32_1 = arith.constant 0 : i32
    return %c0_i32, %c0_i32_0 : i32, i32
  }
}

module attributes {stable_mosaic.version = 11 : i64} {
  func.func @_bn_lrelu_pool_kernel(%arg0: i32, %arg1: memref<1x4x128xf32, #tpu.memory_space<vmem>>, %arg2: memref<1x128xf32, #tpu.memory_space<vmem>>, %arg3: memref<1x128xf32, #tpu.memory_space<vmem>>, %arg4: memref<1x128xf32, #tpu.memory_space<vmem>>, %arg5: memref<1x128xf32, #tpu.memory_space<vmem>>, %arg6: memref<1x1x128xf32, #tpu.memory_space<vmem>>) attributes {dimension_semantics = [#tpu.dimension_semantics<parallel>], iteration_bounds = array<i64: 2>, scalar_prefetch = 0 : i64, scratch_operands = 0 : i64, tpu.core_type = #tpu.core_type<tc>, window_params = [{transform_indices = @transform_0, window_bounds = array<i64: 1, 4, 128>}, {pipeline_mode = #tpu.pipeline_mode<synchronous>, transform_indices = @transform_1, window_bounds = array<i64: 1, 128>}, {pipeline_mode = #tpu.pipeline_mode<synchronous>, transform_indices = @transform_2, window_bounds = array<i64: 1, 128>}, {pipeline_mode = #tpu.pipeline_mode<synchronous>, transform_indices = @transform_3, window_bounds = array<i64: 1, 128>}, {pipeline_mode = #tpu.pipeline_mode<synchronous>, transform_indices = @transform_4, window_bounds = array<i64: 1, 128>}, {transform_indices = @transform_5, window_bounds = array<i64: 1, 1, 128>}]} {
    %c0 = arith.constant 0 : index
    %c0_0 = arith.constant 0 : index
    %0 = vector.load %arg2[%c0, %c0_0] : memref<1x128xf32, #tpu.memory_space<vmem>>, vector<1x128xf32>
    %cst = arith.constant 1.250000e-01 : f32
    %1 = vector.broadcast %cst : f32 to vector<1x128xf32>
    %2 = arith.mulf %0, %1 : vector<1x128xf32>
    %c0_1 = arith.constant 0 : index
    %c0_2 = arith.constant 0 : index
    %3 = vector.load %arg3[%c0_1, %c0_2] : memref<1x128xf32, #tpu.memory_space<vmem>>, vector<1x128xf32>
    %cst_3 = arith.constant 1.250000e-01 : f32
    %4 = vector.broadcast %cst_3 : f32 to vector<1x128xf32>
    %5 = arith.mulf %3, %4 : vector<1x128xf32>
    %6 = arith.mulf %2, %2 : vector<1x128xf32>
    %7 = arith.subf %5, %6 : vector<1x128xf32>
    %cst_4 = arith.constant 0.000000e+00 : f32
    %8 = vector.broadcast %cst_4 : f32 to vector<1x128xf32>
    %9 = arith.maximumf %7, %8 : vector<1x128xf32>
    %c0_5 = arith.constant 0 : index
    %c0_6 = arith.constant 0 : index
    %c0_7 = arith.constant 0 : index
    %10 = vector.load %arg1[%c0_5, %c0_6, %c0_7] : memref<1x4x128xf32, #tpu.memory_space<vmem>>, vector<1x4x128xf32>
    %11 = vector.shape_cast %10 : vector<1x4x128xf32> to vector<4x128xf32>
    %12 = vector.broadcast %2 : vector<1x128xf32> to vector<4x128xf32>
    %13 = arith.subf %11, %12 : vector<4x128xf32>
    %cst_8 = arith.constant 9.99999974E-6 : f32
    %14 = vector.broadcast %cst_8 : f32 to vector<1x128xf32>
    %15 = arith.addf %9, %14 : vector<1x128xf32>
    %16 = math.rsqrt %15 : vector<1x128xf32>
    %17 = vector.broadcast %16 : vector<1x128xf32> to vector<4x128xf32>
    %18 = arith.mulf %13, %17 : vector<4x128xf32>
    %c0_9 = arith.constant 0 : index
    %c0_10 = arith.constant 0 : index
    %19 = vector.load %arg4[%c0_9, %c0_10] : memref<1x128xf32, #tpu.memory_space<vmem>>, vector<1x128xf32>
    %20 = vector.broadcast %19 : vector<1x128xf32> to vector<4x128xf32>
    %21 = arith.mulf %20, %18 : vector<4x128xf32>
    %c0_11 = arith.constant 0 : index
    %c0_12 = arith.constant 0 : index
    %22 = vector.load %arg5[%c0_11, %c0_12] : memref<1x128xf32, #tpu.memory_space<vmem>>, vector<1x128xf32>
    %23 = vector.broadcast %22 : vector<1x128xf32> to vector<4x128xf32>
    %24 = arith.addf %21, %23 : vector<4x128xf32>
    %cst_13 = arith.constant 0.000000e+00 : f32
    %25 = vector.broadcast %cst_13 : f32 to vector<4x128xf32>
    %26 = arith.cmpf ogt, %24, %25 : vector<4x128xf32>
    %cst_14 = arith.constant 2.000000e-01 : f32
    %27 = vector.broadcast %cst_14 : f32 to vector<4x128xf32>
    %28 = arith.mulf %27, %24 : vector<4x128xf32>
    %29 = arith.select %26, %24, %28 : vector<4x128xi1>, vector<4x128xf32>
    %cst_15 = arith.constant dense<0.000000e+00> : vector<128xf32>
    %30 = vector.multi_reduction <add>, %29, %cst_15 [0] : vector<4x128xf32> to vector<128xf32>
    %31 = vector.shape_cast %30 : vector<128xf32> to vector<1x128xf32>
    %c0_16 = arith.constant 0 : index
    %c0_17 = arith.constant 0 : index
    %c0_18 = arith.constant 0 : index
    %32 = vector.load %arg6[%c0_16, %c0_17, %c0_18] : memref<1x1x128xf32, #tpu.memory_space<vmem>>, vector<1x1x128xf32>
    %33 = vector.shape_cast %32 : vector<1x1x128xf32> to vector<1x128xf32>
    %34 = vector.shape_cast %31 : vector<1x128xf32> to vector<1x1x128xf32>
    tpu.vector_store %arg6[%c0_16, %c0_17, %c0_18], %34 {strides = array<i32>} : memref<1x1x128xf32, #tpu.memory_space<vmem>>, vector<1x1x128xf32>,
    return
  }
  func.func @transform_0(%arg0: i32) -> (i32, i32, i32) {
    %c0_i32 = arith.constant 0 : i32
    %c0_i32_0 = arith.constant 0 : i32
    %c0_i32_1 = arith.constant 0 : i32
    return %arg0, %c0_i32, %c0_i32_0 : i32, i32, i32
  }
  func.func @transform_1(%arg0: i32) -> (i32, i32) {
    %c0_i32 = arith.constant 0 : i32
    %c0_i32_0 = arith.constant 0 : i32
    %c0_i32_1 = arith.constant 0 : i32
    return %c0_i32, %c0_i32_0 : i32, i32
  }
  func.func @transform_2(%arg0: i32) -> (i32, i32) {
    %c0_i32 = arith.constant 0 : i32
    %c0_i32_0 = arith.constant 0 : i32
    %c0_i32_1 = arith.constant 0 : i32
    return %c0_i32, %c0_i32_0 : i32, i32
  }
  func.func @transform_3(%arg0: i32) -> (i32, i32) {
    %c0_i32 = arith.constant 0 : i32
    %c0_i32_0 = arith.constant 0 : i32
    %c0_i32_1 = arith.constant 0 : i32
    return %c0_i32, %c0_i32_0 : i32, i32
  }
  func.func @transform_4(%arg0: i32) -> (i32, i32) {
    %c0_i32 = arith.constant 0 : i32
    %c0_i32_0 = arith.constant 0 : i32
    %c0_i32_1 = arith.constant 0 : i32
    return %c0_i32, %c0_i32_0 : i32, i32
  }
  func.func @transform_5(%arg0: i32) -> (i32, i32, i32) {
    %c0_i32 = arith.constant 0 : i32
    %c0_i32_0 = arith.constant 0 : i32
    %c0_i32_1 = arith.constant 0 : i32
    return %arg0, %c0_i32, %c0_i32_0 : i32, i32, i32
  }
}

module attributes {stable_mosaic.version = 11 : i64} {
  func.func @_head_kernel(%arg0: i32, %arg1: memref<2xi32, #tpu.memory_space<smem>>, %arg2: memref<1x1x128xf32, #tpu.memory_space<vmem>>, %arg3: memref<1x128xf32, #tpu.memory_space<vmem>>, %arg4: memref<1x1xf32, #tpu.memory_space<vmem>>, %arg5: memref<10x128xf32, #tpu.memory_space<vmem>>, %arg6: memref<1x128xf32, #tpu.memory_space<vmem>>, %arg7: memref<1x1x1xf32, #tpu.memory_space<vmem>>) attributes {dimension_semantics = [#tpu.dimension_semantics<parallel>], iteration_bounds = array<i64: 2>, scalar_prefetch = 1 : i64, scratch_operands = 0 : i64, tpu.core_type = #tpu.core_type<tc>, window_params = [{transform_indices = @transform_0, window_bounds = array<i64: 1, 1, 128>}, {pipeline_mode = #tpu.pipeline_mode<synchronous>, transform_indices = @transform_1, window_bounds = array<i64: 1, 128>}, {pipeline_mode = #tpu.pipeline_mode<synchronous>, transform_indices = @transform_2, window_bounds = array<i64: 1, 1>}, {pipeline_mode = #tpu.pipeline_mode<synchronous>, transform_indices = @transform_3, window_bounds = array<i64: 10, 128>}, {pipeline_mode = #tpu.pipeline_mode<synchronous>, transform_indices = @transform_4, window_bounds = array<i64: 1, 128>}, {transform_indices = @transform_5, window_bounds = array<i64: 1, 1, 1>}]} {
    %c0 = arith.constant 0 : index
    %c0_0 = arith.constant 0 : index
    %c0_1 = arith.constant 0 : index
    %0 = vector.load %arg2[%c0, %c0_0, %c0_1] : memref<1x1x128xf32, #tpu.memory_space<vmem>>, vector<1x1x128xf32>
    %1 = vector.shape_cast %0 : vector<1x1x128xf32> to vector<1x128xf32>
    %c0_2 = arith.constant 0 : index
    %c0_3 = arith.constant 0 : index
    %2 = vector.load %arg3[%c0_2, %c0_3] : memref<1x128xf32, #tpu.memory_space<vmem>>, vector<1x128xf32>
    %3 = arith.mulf %1, %2 : vector<1x128xf32>
    %cst = arith.constant dense<0.000000e+00> : vector<1xf32>
    %4 = vector.multi_reduction <add>, %3, %cst [1] : vector<1x128xf32> to vector<1xf32>
    %5 = vector.shape_cast %4 : vector<1xf32> to vector<1x1xf32>
    %c0_4 = arith.constant 0 : index
    %c0_5 = arith.constant 0 : index
    %6 = vector.load %arg4[%c0_4, %c0_5] : memref<1x1xf32, #tpu.memory_space<vmem>>, vector<1x1xf32>
    %7 = arith.addf %5, %6 : vector<1x1xf32>
    %8 = arith.index_cast %arg0 : i32 to index
    %9 = memref.load %arg1[%8] : memref<2xi32, #tpu.memory_space<smem>>
    %10 = arith.index_cast %9 : i32 to index
    %c0_6 = arith.constant 0 : index
    %11 = vector.load %arg5[%10, %c0_6] : memref<10x128xf32, #tpu.memory_space<vmem>>, vector<1x128xf32>
    %c0_7 = arith.constant 0 : index
    %c0_8 = arith.constant 0 : index
    %12 = vector.load %arg6[%c0_7, %c0_8] : memref<1x128xf32, #tpu.memory_space<vmem>>, vector<1x128xf32>
    %13 = arith.addf %11, %12 : vector<1x128xf32>
    %14 = arith.mulf %13, %1 : vector<1x128xf32>
    %cst_9 = arith.constant dense<0.000000e+00> : vector<1xf32>
    %15 = vector.multi_reduction <add>, %14, %cst_9 [1] : vector<1x128xf32> to vector<1xf32>
    %16 = vector.shape_cast %15 : vector<1xf32> to vector<1x1xf32>
    %17 = arith.addf %7, %16 : vector<1x1xf32>
    %c0_10 = arith.constant 0 : index
    %c0_11 = arith.constant 0 : index
    %c0_12 = arith.constant 0 : index
    %18 = vector.load %arg7[%c0_10, %c0_11, %c0_12] : memref<1x1x1xf32, #tpu.memory_space<vmem>>, vector<1x1x1xf32>
    %19 = vector.shape_cast %18 : vector<1x1x1xf32> to vector<1x1xf32>
    %20 = vector.shape_cast %17 : vector<1x1xf32> to vector<1x1x1xf32>
    tpu.vector_store %arg7[%c0_10, %c0_11, %c0_12], %20 {strides = array<i32>} : memref<1x1x1xf32, #tpu.memory_space<vmem>>, vector<1x1x1xf32>,
    return
  }
  func.func @transform_0(%arg0: i32, %arg1: memref<2xi32, #tpu.memory_space<smem>>) -> (i32, i32, i32) {
    %c0_i32 = arith.constant 0 : i32
    %c0_i32_0 = arith.constant 0 : i32
    %c0_i32_1 = arith.constant 0 : i32
    return %arg0, %c0_i32, %c0_i32_0 : i32, i32, i32
  }
  func.func @transform_1(%arg0: i32, %arg1: memref<2xi32, #tpu.memory_space<smem>>) -> (i32, i32) {
    %c0_i32 = arith.constant 0 : i32
    %c0_i32_0 = arith.constant 0 : i32
    %c0_i32_1 = arith.constant 0 : i32
    return %c0_i32, %c0_i32_0 : i32, i32
  }
  func.func @transform_2(%arg0: i32, %arg1: memref<2xi32, #tpu.memory_space<smem>>) -> (i32, i32) {
    %c0_i32 = arith.constant 0 : i32
    %c0_i32_0 = arith.constant 0 : i32
    %c0_i32_1 = arith.constant 0 : i32
    return %c0_i32, %c0_i32_0 : i32, i32
  }
  func.func @transform_3(%arg0: i32, %arg1: memref<2xi32, #tpu.memory_space<smem>>) -> (i32, i32) {
    %c0_i32 = arith.constant 0 : i32
    %c0_i32_0 = arith.constant 0 : i32
    %c0_i32_1 = arith.constant 0 : i32
    return %c0_i32, %c0_i32_0 : i32, i32
  }
  func.func @transform_4(%arg0: i32, %arg1: memref<2xi32, #tpu.memory_space<smem>>) -> (i32, i32) {
    %c0_i32 = arith.constant 0 : i32
    %c0_i32_0 = arith.constant 0 : i32
    %c0_i32_1 = arith.constant 0 : i32
    return %c0_i32, %c0_i32_0 : i32, i32
  }
  func.func @transform_5(%arg0: i32, %arg1: memref<2xi32, #tpu.memory_space<smem>>) -> (i32, i32, i32) {
    %c0_i32 = arith.constant 0 : i32
    %c0_i32_0 = arith.constant 0 : i32
    %c0_i32_1 = arith.constant 0 : i32
    return %arg0, %c0_i32, %c0_i32_0 : i32, i32, i32
  }
}

</mosaic_0001>

<llo_original>
// kernel: discriminator_forward.7
$region0: #{discriminator_forward.7}
  #allocation0 [shape = 'u32[]', space=smem, size = 0x4, offset = 0x4, fixed_abs, tag = 'smem constant byte address 0x4 - core index']
  #allocation1 [shape = 'u32[144,128]{1,0:T(1,128)}', space=vmem, size = 0x12000, scoped, tag = 'internal scratch']
  %s0 = inlined_call_operand.vmem [shape: bf16[128,16], index: 0, kind: input, shape index: {}]
  %s1 = inlined_call_operand.vmem [shape: bf16[16,128], index: 1, kind: input, shape index: {}]
  %s2 = inlined_call_operand.vmem [shape: f32[1,128], index: 2, kind: input, shape index: {}]
  %s3 = inlined_call_operand.vmem [shape: f32[128,128], index: 3, kind: output, shape index: {0}]
  %s4 = inlined_call_operand.vmem [shape: f32[1,128], index: 4, kind: output, shape index: {1}]
  %s5 = inlined_call_operand.vmem [shape: f32[1,128], index: 5, kind: output, shape index: {2}]
  %6 = xla_tuple %s3, %s4, %s5
  %s7 = sld [smem:[#allocation0]]
  $region42: #{discriminator_forward.7} parent=0
    _
  %s9 = ssub.s32 1, %s7
  %s10 = scalar_select 0, %s9, %s7
  // Predicated region
  $region2: #{discriminator_forward.7} parent=0 // pred_check
    _
  $region3: #{discriminator_forward.7} parent=0 // pred_check_branch
    %12 = sbr.rel (0) target = $region5
  $region4: #{discriminator_forward.7} parent=0 // pred_region
    _
  $region5: #{discriminator_forward.7} parent=0 // pred_fallthru
    _
  // Predicated region
  $region6: #{discriminator_forward.7} parent=0 // pred_check
    _
  $region7: #{discriminator_forward.7} parent=0 // pred_check_branch
    %14 = sbr.rel (0) target = $region9
  $region8: #{discriminator_forward.7} parent=0 // pred_region
    _
  $region9: #{discriminator_forward.7} parent=0 // pred_fallthru
    _
  // Predicated region
  $region10: #{discriminator_forward.7} parent=0 // pred_check
    _
  $region11: #{discriminator_forward.7} parent=0 // pred_check_branch
    %16 = sbr.rel (0) target = $region13
  $region12: #{discriminator_forward.7} parent=0 // pred_region
    _
  $region13: #{discriminator_forward.7} parent=0 // pred_fallthru
    _
  %v18 = vld [vmem:[%s0] sm:$0xf]
  %v19 = vld [vmem:[%s0 + $0x4] sm:$0xf]
  %v20 = vld [vmem:[%s0 + $0x8] sm:$0xf]
  %v21 = vld [vmem:[%s0 + $0xc] sm:$0xf]
  %v22 = vld [vmem:[%s0 + $0x10] sm:$0xf]
  %v23 = vld [vmem:[%s0 + $0x14] sm:$0xf]
  %v24 = vld [vmem:[%s0 + $0x18] sm:$0xf]
  %v25 = vld [vmem:[%s0 + $0x1c] sm:$0xf]
  %v26 = vld [vmem:[%s0 + $0x20] sm:$0xf]
  %v27 = vld [vmem:[%s0 + $0x24] sm:$0xf]
  %v28 = vld [vmem:[%s0 + $0x28] sm:$0xf]
  %v29 = vld [vmem:[%s0 + $0x2c] sm:$0xf]
  %v30 = vld [vmem:[%s0 + $0x30] sm:$0xf]
  %v31 = vld [vmem:[%s0 + $0x34] sm:$0xf]
  %v32 = vld [vmem:[%s0 + $0x38] sm:$0xf]
  %v33 = vld [vmem:[%s0 + $0x3c] sm:$0xf]
  %v34 = vld [vmem:[%s1] sm:$0xf]
  %v35 = vld [vmem:[%s1 + $0x4] sm:$0xf]
  %v36 = vld [vmem:[%s2] sm:$0x1]
  %v38 = vlaneseq
  %v39 = vshrl.u32 %v38, 7
  %v40 = vsub.s32 0, %v39
  %v41 = vrot.slane %v36, %v40
  %v59 = vunpack.c.l.b16 %v18
  %v60 = vunpack.c.l.b16 %v19
  %v61 = vunpack.c.l.b16 %v20
  %v62 = vunpack.c.l.b16 %v21
  %v63 = vunpack.c.l.b16 %v22
  %v64 = vunpack.c.l.b16 %v23
  %v65 = vunpack.c.l.b16 %v24
  %v66 = vunpack.c.l.b16 %v25
  %v67 = vunpack.c.l.b16 %v26
  %v68 = vunpack.c.l.b16 %v27
  %v69 = vunpack.c.l.b16 %v28
  %v70 = vunpack.c.l.b16 %v29
  %v71 = vunpack.c.l.b16 %v30
  %v72 = vunpack.c.l.b16 %v31
  %v73 = vunpack.c.l.b16 %v32
  %v74 = vunpack.c.l.b16 %v33
  %v75 = vpack.c.b16 %v60, %v59
  %v76 = vpack.c.b16 %v62, %v61
  %v77 = vpack.c.b16 %v64, %v63
  %v78 = vpack.c.b16 %v66, %v65
  %v79 = vpack.c.b16 %v68, %v67
  %v80 = vpack.c.b16 %v70, %v69
  %v81 = vpack.c.b16 %v72, %v71
  %v82 = vpack.c.b16 %v74, %v73
  %v85 = vunpack.c.l.b16 %v34
  %v86 = vunpack.c.l.b16 %v35
  %v87 = vpack.c.b16 %v86, %v85
  %vm89 = vcmask 130048
  %v91 = vsel %vm89, %v75, 0
  %v94 = vsel %vm89, %v76, 0
  %v97 = vsel %vm89, %v77, 0
  %v100 = vsel %vm89, %v78, 0
  %v103 = vsel %vm89, %v79, 0
  %v106 = vsel %vm89, %v80, 0
  %v109 = vsel %vm89, %v81, 0
  %v112 = vsel %vm89, %v82, 0
  %114 = vmatprep.subr.bf16.mxu0 0
  %115 = vmatpush1.bf16.msra.mxu0 0
  %116 = vmatprep.subr.bf16.mxu0 0
  %117 = vmatpush1.bf16.msra.mxu0 0
  %118 = vmatprep.subr.bf16.mxu0 0
  %119 = vmatpush1.bf16.msra.mxu0 0
  %120 = vmatprep.subr.bf16.mxu0 0
  %121 = vmatpush1.bf16.msra.mxu0 0
  %122 = vmatprep.subr.bf16.mxu0 0
  %123 = vmatpush1.bf16.msra.mxu0 0
  %124 = vmatprep.subr.bf16.mxu0 0
  %125 = vmatpush1.bf16.msra.mxu0 0
  %126 = vmatprep.subr.bf16.mxu0 0
  %127 = vmatpush1.bf16.msra.mxu0 0
  %128 = vmatprep.subr.bf16.mxu0 0
  %129 = vmatpush1.bf16.msra.mxu0 %v87
  %130 = vmatprep.subr.bf16.mxu0 0
  %131 = vmatpush2.bf16.msra.mxu0 0
  %132 = vmatprep.subr.bf16.mxu0 0
  %133 = vmatpush2.bf16.msra.mxu0 0
  %134 = vmatprep.subr.bf16.mxu0 0
  %135 = vmatpush2.bf16.msra.mxu0 0
  %136 = vmatprep.subr.bf16.mxu0 0
  %137 = vmatpush2.bf16.msra.mxu0 0
  %138 = vmatprep.subr.bf16.mxu0 0
  %139 = vmatpush2.bf16.msra.mxu0 0
  %140 = vmatprep.subr.bf16.mxu0 0
  %141 = vmatpush2.bf16.msra.mxu0 0
  %142 = vmatprep.subr.bf16.mxu0 0
  %143 = vmatpush2.bf16.msra.mxu0 0
  %144 = vmatprep.subr.bf16.mxu0 0
  %145 = vmatpush2.bf16.msra.mxu0 0
  %146 = vmatprep.mubr.bf16.mxu0 0
  %147 = vmatmul.mubr.bf16.gmra.mxu0 %v91
  %v148 = vpop.f32.mrf.mxu0
  %v149 = vadd.f32 %v41, %v148
  %v150 = vpop.f32.mrf.mxu0
  %v151 = vpop.f32.mrf.mxu0
  %v152 = vadd.f32 %v41, %v151
  %v153 = vpop.f32.mrf.mxu0
  %154 = vmatprep.mubr.bf16.mxu0 0
  %155 = vmatmul.mubr.bf16.gmra.mxu0 %v94
  %v156 = vpop.f32.mrf.mxu0
  %v157 = vadd.f32 %v41, %v156
  %v158 = vpop.f32.mrf.mxu0
  %v159 = vpop.f32.mrf.mxu0
  %v160 = vadd.f32 %v41, %v159
  %v161 = vpop.f32.mrf.mxu0
  %162 = vmatprep.mubr.bf16.mxu0 0
  %163 = vmatmul.mubr.bf16.gmra.mxu0 %v97
  %v164 = vpop.f32.mrf.mxu0
  %v165 = vadd.f32 %v41, %v164
  %v166 = vpop.f32.mrf.mxu0
  %v167 = vpop.f32.mrf.mxu0
  %v168 = vadd.f32 %v41, %v167
  %v169 = vpop.f32.mrf.mxu0
  %170 = vmatprep.mubr.bf16.mxu0 0
  %171 = vmatmul.mubr.bf16.gmra.mxu0 %v100
  %v172 = vpop.f32.mrf.mxu0
  %v173 = vadd.f32 %v41, %v172
  %v174 = vpop.f32.mrf.mxu0
  %v175 = vpop.f32.mrf.mxu0
  %v176 = vadd.f32 %v41, %v175
  %v177 = vpop.f32.mrf.mxu0
  %178 = vmatprep.mubr.bf16.mxu0 0
  %179 = vmatmul.mubr.bf16.gmra.mxu0 %v103
  %v180 = vpop.f32.mrf.mxu0
  %v181 = vadd.f32 %v41, %v180
  %v182 = vpop.f32.mrf.mxu0
  %v183 = vpop.f32.mrf.mxu0
  %v184 = vadd.f32 %v41, %v183
  %v185 = vpop.f32.mrf.mxu0
  %186 = vmatprep.mubr.bf16.mxu0 0
  %187 = vmatmul.mubr.bf16.gmra.mxu0 %v106
  %v188 = vpop.f32.mrf.mxu0
  %v189 = vadd.f32 %v41, %v188
  %v190 = vpop.f32.mrf.mxu0
  %v191 = vpop.f32.mrf.mxu0
  %v192 = vadd.f32 %v41, %v191
  %v193 = vpop.f32.mrf.mxu0
  %194 = vmatprep.mubr.bf16.mxu0 0
  %195 = vmatmul.mubr.bf16.gmra.mxu0 %v109
  %v196 = vpop.f32.mrf.mxu0
  %v197 = vadd.f32 %v41, %v196
  %v198 = vpop.f32.mrf.mxu0
  %v199 = vpop.f32.mrf.mxu0
  %v200 = vadd.f32 %v41, %v199
  %v201 = vpop.f32.mrf.mxu0
  %202 = vmatprep.mubr.bf16.mxu0 0
  %203 = vmatmul.mubr.bf16.gmra.mxu0 %v112
  %v204 = vpop.f32.mrf.mxu0
  %v205 = vadd.f32 %v41, %v204
  %v206 = vpop.f32.mrf.mxu0
  %v207 = vpop.f32.mrf.mxu0
  %v208 = vadd.f32 %v41, %v207
  %v209 = vpop.f32.mrf.mxu0
  %210 = vdwg.mxu0
  %211 = vst [vmem:[%s3] sm:$0xff] %v149
  %212 = vst [vmem:[%s3 + $0x8] sm:$0xff] %v152
  %213 = vst [vmem:[%s3 + $0x10] sm:$0xff] %v157
  %214 = vst [vmem:[%s3 + $0x18] sm:$0xff] %v160
  %215 = vst [vmem:[%s3 + $0x20] sm:$0xff] %v165
  %216 = vst [vmem:[%s3 + $0x28] sm:$0xff] %v168
  %217 = vst [vmem:[%s3 + $0x30] sm:$0xff] %v173
  %218 = vst [vmem:[%s3 + $0x38] sm:$0xff] %v176
  %219 = vst [vmem:[%s3 + $0x40] sm:$0xff] %v181
  %220 = vst [vmem:[%s3 + $0x48] sm:$0xff] %v184
  %221 = vst [vmem:[%s3 + $0x50] sm:$0xff] %v189
  %222 = vst [vmem:[%s3 + $0x58] sm:$0xff] %v192
  %223 = vst [vmem:[%s3 + $0x60] sm:$0xff] %v197
  %224 = vst [vmem:[%s3 + $0x68] sm:$0xff] %v200
  %225 = vst [vmem:[%s3 + $0x70] sm:$0xff] %v205
  %226 = vst [vmem:[%s3 + $0x78] sm:$0xff] %v208
  %p227 = scmp.eq.s32.totalorder 0, 0
  // Predicated region
  $region14: #{discriminator_forward.7} parent=0 // pred_check
    %p228 = pneg %p227
  $region15: #{discriminator_forward.7} parent=0 // pred_check_branch
    %230 = sbr.rel (%p228) target = $region17
  $region16: #{discriminator_forward.7} parent=0 // pred_region
    %231 = vst [vmem:[%s4] sm:$0x1] 0.0
    %232 = vst [vmem:[%s5] sm:$0x1] 0.0
  $region17: #{discriminator_forward.7} parent=0 // pred_fallthru
    _
  %v233 = vld [vmem:[%s4] sm:$0x1]
  %v234 = vadd.f32 %v149, %v152
  %v235 = vadd.f32 %v234, %v157
  %v236 = vadd.f32 %v235, %v160
  %v237 = vadd.f32 %v236, %v165
  %v238 = vadd.f32 %v237, %v168
  %v239 = vadd.f32 %v238, %v173
  %v240 = vadd.f32 %v239, %v176
  %v241 = vadd.f32 %v240, %v181
  %v242 = vadd.f32 %v241, %v184
  %v243 = vadd.f32 %v242, %v189
  %v244 = vadd.f32 %v243, %v192
  %v245 = vadd.f32 %v244, %v197
  %v246 = vadd.f32 %v245, %v200
  %v247 = vadd.f32 %v246, %v205
  %v248 = vadd.f32 %v247, %v208
  %v249 = vrot.slane %v248, 4
  %v250 = vadd.f32 %v248, %v249
  %v251 = vrot.slane %v250, 2
  %v252 = vadd.f32 %v250, %v251
  %v253 = vrot.slane %v252, 1
  %v254 = vadd.f32 %v252, %v253
  %v255 = vadd.f32 %v233, %v254
  %256 = vst [vmem:[%s4] sm:$0x1] %v255
  %v257 = vld [vmem:[%s5] sm:$0x1]
  %v258 = vmul.f32 %v149, %v149
  %v259 = vmul.f32 %v152, %v152
  %v260 = vmul.f32 %v157, %v157
  %v261 = vmul.f32 %v160, %v160
  %v262 = vmul.f32 %v165, %v165
  %v263 = vmul.f32 %v168, %v168
  %v264 = vmul.f32 %v173, %v173
  %v265 = vmul.f32 %v176, %v176
  %v266 = vmul.f32 %v181, %v181
  %v267 = vmul.f32 %v184, %v184
  %v268 = vmul.f32 %v189, %v189
  %v269 = vmul.f32 %v192, %v192
  %v270 = vmul.f32 %v197, %v197
  %v271 = vmul.f32 %v200, %v200
  %v272 = vmul.f32 %v205, %v205
  %v273 = vmul.f32 %v208, %v208
  %v274 = vadd.f32 %v258, %v259
  %v275 = vadd.f32 %v274, %v260
  %v276 = vadd.f32 %v275, %v261
  %v277 = vadd.f32 %v276, %v262
  %v278 = vadd.f32 %v277, %v263
  %v279 = vadd.f32 %v278, %v264
  %v280 = vadd.f32 %v279, %v265
  %v281 = vadd.f32 %v280, %v266
  %v282 = vadd.f32 %v281, %v267
  %v283 = vadd.f32 %v282, %v268
  %v284 = vadd.f32 %v283, %v269
  %v285 = vadd.f32 %v284, %v270
  %v286 = vadd.f32 %v285, %v271
  %v287 = vadd.f32 %v286, %v272
  %v288 = vadd.f32 %v287, %v273
  %v289 = vrot.slane %v288, 4
  %v290 = vadd.f32 %v288, %v289
  %v291 = vrot.slane %v290, 2
  %v292 = vadd.f32 %v290, %v291
  %v293 = vrot.slane %v292, 1
  %v294 = vadd.f32 %v292, %v293
  %v295 = vadd.f32 %v257, %v294
  %296 = vst [vmem:[%s5] sm:$0x1] %v295
  // Predicated region
  $region18: #{discriminator_forward.7} parent=0 // pred_check
    _
  $region19: #{discriminator_forward.7} parent=0 // pred_check_branch
    %298 = sbr.rel (0) target = $region21
  $region20: #{discriminator_forward.7} parent=0 // pred_region
    _
  $region21: #{discriminator_forward.7} parent=0 // pred_fallthru
    _
  // Predicated region
  $region22: #{discriminator_forward.7} parent=0 // pred_check
    _
  $region23: #{discriminator_forward.7} parent=0 // pred_check_branch
    %300 = sbr.rel (0) target = $region25
  $region24: #{discriminator_forward.7} parent=0 // pred_region
    _
  $region25: #{discriminator_forward.7} parent=0 // pred_fallthru
    _
  // Predicated region
  $region26: #{discriminator_forward.7} parent=0 // pred_check
    _
  $region27: #{discriminator_forward.7} parent=0 // pred_check_branch
    %302 = sbr.rel (0) target = $region29
  $region28: #{discriminator_forward.7} parent=0 // pred_region
    _
  $region29: #{discriminator_forward.7} parent=0 // pred_fallthru
    _
  // Predicated region
  $region30: #{discriminator_forward.7} parent=0 // pred_check
    _
  $region31: #{discriminator_forward.7} parent=0 // pred_check_branch
    %304 = sbr.rel (0) target = $region33
  $region32: #{discriminator_forward.7} parent=0 // pred_region
    _
  $region33: #{discriminator_forward.7} parent=0 // pred_fallthru
    _
  // Predicated region
  $region34: #{discriminator_forward.7} parent=0 // pred_check
    _
  $region35: #{discriminator_forward.7} parent=0 // pred_check_branch
    %306 = sbr.rel (0) target = $region37
  $region36: #{discriminator_forward.7} parent=0 // pred_region
    _
  $region37: #{discriminator_forward.7} parent=0 // pred_fallthru
    _
  // Predicated region
  $region38: #{discriminator_forward.7} parent=0 // pred_check
    _
  $region39: #{discriminator_forward.7} parent=0 // pred_check_branch
    %308 = sbr.rel (0) target = $region41
  $region40: #{discriminator_forward.7} parent=0 // pred_region
    _
  $region41: #{discriminator_forward.7} parent=0 // pred_fallthru
    _

// kernel: discriminator_forward.8
$region0: #{discriminator_forward.8}
  #allocation0 [shape = 'u32[]', space=smem, size = 0x4, offset = 0x4, fixed_abs, tag = 'smem constant byte address 0x4 - core index']
  #allocation1 [shape = 'u32[144,128]{1,0:T(1,128)}', space=vmem, size = 0x12000, scoped, tag = 'internal scratch']
  %s0 = inlined_call_operand.vmem [shape: f32[128,128], index: 0, kind: input, shape index: {}]
  %s1 = inlined_call_operand.vmem [shape: f32[1,128], index: 1, kind: input, shape index: {}]
  %s2 = inlined_call_operand.vmem [shape: f32[1,128], index: 2, kind: input, shape index: {}]
  %s3 = inlined_call_operand.vmem [shape: f32[1,128], index: 3, kind: input, shape index: {}]
  %s4 = inlined_call_operand.vmem [shape: f32[1,128], index: 4, kind: input, shape index: {}]
  %s5 = inlined_call_operand.vmem [shape: bf16[128,128], index: 5, kind: output, shape index: {}]
  %s6 = sld [smem:[#allocation0]]
  $region30: #{discriminator_forward.8} parent=0
    _
  %s8 = ssub.s32 1, %s6
  %s9 = scalar_select 0, %s8, %s6
  // Predicated region
  $region2: #{discriminator_forward.8} parent=0 // pred_check
    _
  $region3: #{discriminator_forward.8} parent=0 // pred_check_branch
    %11 = sbr.rel (0) target = $region5
  $region4: #{discriminator_forward.8} parent=0 // pred_region
    _
  $region5: #{discriminator_forward.8} parent=0 // pred_fallthru
    _
  // Predicated region
  $region6: #{discriminator_forward.8} parent=0 // pred_check
    _
  $region7: #{discriminator_forward.8} parent=0 // pred_check_branch
    %13 = sbr.rel (0) target = $region9
  $region8: #{discriminator_forward.8} parent=0 // pred_region
    _
  $region9: #{discriminator_forward.8} parent=0 // pred_fallthru
    _
  // Predicated region
  $region10: #{discriminator_forward.8} parent=0 // pred_check
    _
  $region11: #{discriminator_forward.8} parent=0 // pred_check_branch
    %15 = sbr.rel (0) target = $region13
  $region12: #{discriminator_forward.8} parent=0 // pred_region
    _
  $region13: #{discriminator_forward.8} parent=0 // pred_fallthru
    _
  // Predicated region
  $region14: #{discriminator_forward.8} parent=0 // pred_check
    _
  $region15: #{discriminator_forward.8} parent=0 // pred_check_branch
    %17 = sbr.rel (0) target = $region17
  $region16: #{discriminator_forward.8} parent=0 // pred_region
    _
  $region17: #{discriminator_forward.8} parent=0 // pred_fallthru
    _
  // Predicated region
  $region18: #{discriminator_forward.8} parent=0 // pred_check
    _
  $region19: #{discriminator_forward.8} parent=0 // pred_check_branch
    %19 = sbr.rel (0) target = $region21
  $region20: #{discriminator_forward.8} parent=0 // pred_region
    _
  $region21: #{discriminator_forward.8} parent=0 // pred_fallthru
    _
  %v20 = vld [vmem:[%s1] sm:$0x1]
  %v21 = vmul.f32 %v20, 0.0078125
  %v22 = vld [vmem:[%s2] sm:$0x1]
  %v23 = vmul.f32 %v22, 0.0078125
  %v24 = vmul.f32 %v21, %v21
  %v25 = vsub.f32 %v23, %v24
  %v26 = vmax.f32 %v25, 0.0
  %v27 = vld [vmem:[%s0] sm:$0xff]
  %v28 = vld [vmem:[%s0 + $0x8] sm:$0xff]
  %v29 = vld [vmem:[%s0 + $0x10] sm:$0xff]
  %v30 = vld [vmem:[%s0 + $0x18] sm:$0xff]
  %v31 = vld [vmem:[%s0 + $0x20] sm:$0xff]
  %v32 = vld [vmem:[%s0 + $0x28] sm:$0xff]
  %v33 = vld [vmem:[%s0 + $0x30] sm:$0xff]
  %v34 = vld [vmem:[%s0 + $0x38] sm:$0xff]
  %v35 = vld [vmem:[%s0 + $0x40] sm:$0xff]
  %v36 = vld [vmem:[%s0 + $0x48] sm:$0xff]
  %v37 = vld [vmem:[%s0 + $0x50] sm:$0xff]
  %v38 = vld [vmem:[%s0 + $0x58] sm:$0xff]
  %v39 = vld [vmem:[%s0 + $0x60] sm:$0xff]
  %v40 = vld [vmem:[%s0 + $0x68] sm:$0xff]
  %v41 = vld [vmem:[%s0 + $0x70] sm:$0xff]
  %v42 = vld [vmem:[%s0 + $0x78] sm:$0xff]
  %v44 = vlaneseq
  %v45 = vshrl.u32 %v44, 7
  %v46 = vsub.s32 0, %v45
  %v47 = vrot.slane %v21, %v46
  %v49 = vsub.f32 %v27, %v47
  %v50 = vsub.f32 %v28, %v47
  %v51 = vsub.f32 %v29, %v47
  %v52 = vsub.f32 %v30, %v47
  %v53 = vsub.f32 %v31, %v47
  %v54 = vsub.f32 %v32, %v47
  %v55 = vsub.f32 %v33, %v47
  %v56 = vsub.f32 %v34, %v47
  %v57 = vsub.f32 %v35, %v47
  %v58 = vsub.f32 %v36, %v47
  %v59 = vsub.f32 %v37, %v47
  %v60 = vsub.f32 %v38, %v47
  %v61 = vsub.f32 %v39, %v47
  %v62 = vsub.f32 %v40, %v47
  %v63 = vsub.f32 %v41, %v47
  %v64 = vsub.f32 %v42, %v47
  %v65 = vadd.f32 %v26, 1e-05
  %v66 = vrsqrt.pop %v65
  %v68 = vlaneseq
  %v69 = vshrl.u32 %v68, 7
  %v70 = vsub.s32 0, %v69
  %v71 = vrot.slane %v66, %v70
  %v73 = vmul.f32 %v49, %v71
  %v74 = vmul.f32 %v50, %v71
  %v75 = vmul.f32 %v51, %v71
  %v76 = vmul.f32 %v52, %v71
  %v77 = vmul.f32 %v53, %v71
  %v78 = vmul.f32 %v54, %v71
  %v79 = vmul.f32 %v55, %v71
  %v80 = vmul.f32 %v56, %v71
  %v81 = vmul.f32 %v57, %v71
  %v82 = vmul.f32 %v58, %v71
  %v83 = vmul.f32 %v59, %v71
  %v84 = vmul.f32 %v60, %v71
  %v85 = vmul.f32 %v61, %v71
  %v86 = vmul.f32 %v62, %v71
  %v87 = vmul.f32 %v63, %v71
  %v88 = vmul.f32 %v64, %v71
  %v89 = vld [vmem:[%s3] sm:$0x1]
  %v91 = vlaneseq
  %v92 = vshrl.u32 %v91, 7
  %v93 = vsub.s32 0, %v92
  %v94 = vrot.slane %v89, %v93
  %v96 = vmul.f32 %v94, %v73
  %v97 = vmul.f32 %v94, %v74
  %v98 = vmul.f32 %v94, %v75
  %v99 = vmul.f32 %v94, %v76
  %v100 = vmul.f32 %v94, %v77
  %v101 = vmul.f32 %v94, %v78
  %v102 = vmul.f32 %v94, %v79
  %v103 = vmul.f32 %v94, %v80
  %v104 = vmul.f32 %v94, %v81
  %v105 = vmul.f32 %v94, %v82
  %v106 = vmul.f32 %v94, %v83
  %v107 = vmul.f32 %v94, %v84
  %v108 = vmul.f32 %v94, %v85
  %v109 = vmul.f32 %v94, %v86
  %v110 = vmul.f32 %v94, %v87
  %v111 = vmul.f32 %v94, %v88
  %v112 = vld [vmem:[%s4] sm:$0x1]
  %v114 = vlaneseq
  %v115 = vshrl.u32 %v114, 7
  %v116 = vsub.s32 0, %v115
  %v117 = vrot.slane %v112, %v116
  %v119 = vadd.f32 %v96, %v117
  %v120 = vadd.f32 %v97, %v117
  %v121 = vadd.f32 %v98, %v117
  %v122 = vadd.f32 %v99, %v117
  %v123 = vadd.f32 %v100, %v117
  %v124 = vadd.f32 %v101, %v117
  %v125 = vadd.f32 %v102, %v117
  %v126 = vadd.f32 %v103, %v117
  %v127 = vadd.f32 %v104, %v117
  %v128 = vadd.f32 %v105, %v117
  %v129 = vadd.f32 %v106, %v117
  %v130 = vadd.f32 %v107, %v117
  %v131 = vadd.f32 %v108, %v117
  %v132 = vadd.f32 %v109, %v117
  %v133 = vadd.f32 %v110, %v117
  %v134 = vadd.f32 %v111, %v117
  %vm135 = vcmp.gt.f32.partialorder %v119, 0.0
  %vm136 = vcmp.gt.f32.partialorder %v120, 0.0
  %vm137 = vcmp.gt.f32.partialorder %v121, 0.0
  %vm138 = vcmp.gt.f32.partialorder %v122, 0.0
  %vm139 = vcmp.gt.f32.partialorder %v123, 0.0
  %vm140 = vcmp.gt.f32.partialorder %v124, 0.0
  %vm141 = vcmp.gt.f32.partialorder %v125, 0.0
  %vm142 = vcmp.gt.f32.partialorder %v126, 0.0
  %vm143 = vcmp.gt.f32.partialorder %v127, 0.0
  %vm144 = vcmp.gt.f32.partialorder %v128, 0.0
  %vm145 = vcmp.gt.f32.partialorder %v129, 0.0
  %vm146 = vcmp.gt.f32.partialorder %v130, 0.0
  %vm147 = vcmp.gt.f32.partialorder %v131, 0.0
  %vm148 = vcmp.gt.f32.partialorder %v132, 0.0
  %vm149 = vcmp.gt.f32.partialorder %v133, 0.0
  %vm150 = vcmp.gt.f32.partialorder %v134, 0.0
  %v151 = vmul.f32 %v119, 0.2
  %v152 = vmul.f32 %v120, 0.2
  %v153 = vmul.f32 %v121, 0.2
  %v154 = vmul.f32 %v122, 0.2
  %v155 = vmul.f32 %v123, 0.2
  %v156 = vmul.f32 %v124, 0.2
  %v157 = vmul.f32 %v125, 0.2
  %v158 = vmul.f32 %v126, 0.2
  %v159 = vmul.f32 %v127, 0.2
  %v160 = vmul.f32 %v128, 0.2
  %v161 = vmul.f32 %v129, 0.2
  %v162 = vmul.f32 %v130, 0.2
  %v163 = vmul.f32 %v131, 0.2
  %v164 = vmul.f32 %v132, 0.2
  %v165 = vmul.f32 %v133, 0.2
  %v166 = vmul.f32 %v134, 0.2
  %v167 = vsel %vm135, %v119, %v151
  %v168 = vsel %vm136, %v120, %v152
  %v169 = vsel %vm137, %v121, %v153
  %v170 = vsel %vm138, %v122, %v154
  %v171 = vsel %vm139, %v123, %v155
  %v172 = vsel %vm140, %v124, %v156
  %v173 = vsel %vm141, %v125, %v157
  %v174 = vsel %vm142, %v126, %v158
  %v175 = vsel %vm143, %v127, %v159
  %v176 = vsel %vm144, %v128, %v160
  %v177 = vsel %vm145, %v129, %v161
  %v178 = vsel %vm146, %v130, %v162
  %v179 = vsel %vm147, %v131, %v163
  %v180 = vsel %vm148, %v132, %v164
  %v181 = vsel %vm149, %v133, %v165
  %v182 = vsel %vm150, %v134, %v166
  %v183 = vpack.c.bf16 %v168, %v167
  %v184 = vpack.c.bf16 %v170, %v169
  %v185 = vpack.c.bf16 %v172, %v171
  %v186 = vpack.c.bf16 %v174, %v173
  %v187 = vpack.c.bf16 %v176, %v175
  %v188 = vpack.c.bf16 %v178, %v177
  %v189 = vpack.c.bf16 %v180, %v179
  %v190 = vpack.c.bf16 %v182, %v181
  %v199 = vunpack.c.l.b16 %v183
  %v200 = vunpack.c.h.b16 %v183
  %v201 = vunpack.c.l.b16 %v184
  %v202 = vunpack.c.h.b16 %v184
  %v203 = vunpack.c.l.b16 %v185
  %v204 = vunpack.c.h.b16 %v185
  %v205 = vunpack.c.l.b16 %v186
  %v206 = vunpack.c.h.b16 %v186
  %v207 = vunpack.c.l.b16 %v187
  %v208 = vunpack.c.h.b16 %v187
  %v209 = vunpack.c.l.b16 %v188
  %v210 = vunpack.c.h.b16 %v188
  %v211 = vunpack.c.l.b16 %v189
  %v212 = vunpack.c.h.b16 %v189
  %v213 = vunpack.c.l.b16 %v190
  %v214 = vunpack.c.h.b16 %v190
  %v215 = vpack.c.b16 %v199, %v199
  %v216 = vpack.c.b16 %v200, %v200
  %v217 = vpack.c.b16 %v201, %v201
  %v218 = vpack.c.b16 %v202, %v202
  %v219 = vpack.c.b16 %v203, %v203
  %v220 = vpack.c.b16 %v204, %v204
  %v221 = vpack.c.b16 %v205, %v205
  %v222 = vpack.c.b16 %v206, %v206
  %v223 = vpack.c.b16 %v207, %v207
  %v224 = vpack.c.b16 %v208, %v208
  %v225 = vpack.c.b16 %v209, %v209
  %v226 = vpack.c.b16 %v210, %v210
  %v227 = vpack.c.b16 %v211, %v211
  %v228 = vpack.c.b16 %v212, %v212
  %v229 = vpack.c.b16 %v213, %v213
  %v230 = vpack.c.b16 %v214, %v214
  %247 = vst [vmem:[%s5] sm:$0xf] %v215
  %248 = vst [vmem:[%s5 + $0x4] sm:$0xf] %v216
  %249 = vst [vmem:[%s5 + $0x8] sm:$0xf] %v217
  %250 = vst [vmem:[%s5 + $0xc] sm:$0xf] %v218
  %251 = vst [vmem:[%s5 + $0x10] sm:$0xf] %v219
  %252 = vst [vmem:[%s5 + $0x14] sm:$0xf] %v220
  %253 = vst [vmem:[%s5 + $0x18] sm:$0xf] %v221
  %254 = vst [vmem:[%s5 + $0x1c] sm:$0xf] %v222
  %255 = vst [vmem:[%s5 + $0x20] sm:$0xf] %v223
  %256 = vst [vmem:[%s5 + $0x24] sm:$0xf] %v224
  %257 = vst [vmem:[%s5 + $0x28] sm:$0xf] %v225
  %258 = vst [vmem:[%s5 + $0x2c] sm:$0xf] %v226
  %259 = vst [vmem:[%s5 + $0x30] sm:$0xf] %v227
  %260 = vst [vmem:[%s5 + $0x34] sm:$0xf] %v228
  %261 = vst [vmem:[%s5 + $0x38] sm:$0xf] %v229
  %262 = vst [vmem:[%s5 + $0x3c] sm:$0xf] %v230
  // Predicated region
  $region22: #{discriminator_forward.8} parent=0 // pred_check
    _
  $region23: #{discriminator_forward.8} parent=0 // pred_check_branch
    %264 = sbr.rel (0) target = $region25
  $region24: #{discriminator_forward.8} parent=0 // pred_region
    _
  $region25: #{discriminator_forward.8} parent=0 // pred_fallthru
    _
  // Predicated region
  $region26: #{discriminator_forward.8} parent=0 // pred_check
    _
  $region27: #{discriminator_forward.8} parent=0 // pred_check_branch
    %266 = sbr.rel (0) target = $region29
  $region28: #{discriminator_forward.8} parent=0 // pred_region
    _
  $region29: #{discriminator_forward.8} parent=0 // pred_fallthru
    _

// kernel: discriminator_forward.9
$region0: #{discriminator_forward.9}
  #allocation0 [shape = 'u32[]', space=smem, size = 0x4, offset = 0x4, fixed_abs, tag = 'smem constant byte address 0x4 - core index']
  #allocation1 [shape = 'u32[144,128]{1,0:T(1,128)}', space=vmem, size = 0x12000, scoped, tag = 'internal scratch']
  %s0 = inlined_call_operand.vmem [shape: bf16[32,128], index: 0, kind: input, shape index: {}]
  %s1 = inlined_call_operand.vmem [shape: bf16[128,128], index: 1, kind: input, shape index: {}]
  %s2 = inlined_call_operand.vmem [shape: f32[1,128], index: 2, kind: input, shape index: {}]
  %s3 = inlined_call_operand.vmem [shape: f32[32,128], index: 3, kind: output, shape index: {0}]
  %s4 = inlined_call_operand.vmem [shape: f32[1,128], index: 4, kind: output, shape index: {1}]
  %s5 = inlined_call_operand.vmem [shape: f32[1,128], index: 5, kind: output, shape index: {2}]
  %6 = xla_tuple %s3, %s4, %s5
  %s7 = sld [smem:[#allocation0]]
  $region42: #{discriminator_forward.9} parent=0
    _
  %s9 = ssub.s32 1, %s7
  %s10 = scalar_select 0, %s9, %s7
  // Predicated region
  $region2: #{discriminator_forward.9} parent=0 // pred_check
    _
  $region3: #{discriminator_forward.9} parent=0 // pred_check_branch
    %12 = sbr.rel (0) target = $region5
  $region4: #{discriminator_forward.9} parent=0 // pred_region
    _
  $region5: #{discriminator_forward.9} parent=0 // pred_fallthru
    _
  // Predicated region
  $region6: #{discriminator_forward.9} parent=0 // pred_check
    _
  $region7: #{discriminator_forward.9} parent=0 // pred_check_branch
    %14 = sbr.rel (0) target = $region9
  $region8: #{discriminator_forward.9} parent=0 // pred_region
    _
  $region9: #{discriminator_forward.9} parent=0 // pred_fallthru
    _
  // Predicated region
  $region10: #{discriminator_forward.9} parent=0 // pred_check
    _
  $region11: #{discriminator_forward.9} parent=0 // pred_check_branch
    %16 = sbr.rel (0) target = $region13
  $region12: #{discriminator_forward.9} parent=0 // pred_region
    _
  $region13: #{discriminator_forward.9} parent=0 // pred_fallthru
    _
  %v18 = vld [vmem:[%s0] sm:$0xf]
  %v19 = vld [vmem:[%s0 + $0x4] sm:$0xf]
  %v20 = vld [vmem:[%s0 + $0x8] sm:$0xf]
  %v21 = vld [vmem:[%s0 + $0xc] sm:$0xf]
  %v22 = vld [vmem:[%s1] sm:$0xf]
  %v23 = vld [vmem:[%s1 + $0x4] sm:$0xf]
  %v24 = vld [vmem:[%s1 + $0x8] sm:$0xf]
  %v25 = vld [vmem:[%s1 + $0xc] sm:$0xf]
  %v26 = vld [vmem:[%s1 + $0x10] sm:$0xf]
  %v27 = vld [vmem:[%s1 + $0x14] sm:$0xf]
  %v28 = vld [vmem:[%s1 + $0x18] sm:$0xf]
  %v29 = vld [vmem:[%s1 + $0x1c] sm:$0xf]
  %v30 = vld [vmem:[%s1 + $0x20] sm:$0xf]
  %v31 = vld [vmem:[%s1 + $0x24] sm:$0xf]
  %v32 = vld [vmem:[%s1 + $0x28] sm:$0xf]
  %v33 = vld [vmem:[%s1 + $0x2c] sm:$0xf]
  %v34 = vld [vmem:[%s1 + $0x30] sm:$0xf]
  %v35 = vld [vmem:[%s1 + $0x34] sm:$0xf]
  %v36 = vld [vmem:[%s1 + $0x38] sm:$0xf]
  %v37 = vld [vmem:[%s1 + $0x3c] sm:$0xf]
  %v38 = vld [vmem:[%s2] sm:$0x1]
  %v40 = vlaneseq
  %v41 = vshrl.u32 %v40, 7
  %v42 = vsub.s32 0, %v41
  %v43 = vrot.slane %v38, %v42
  %v49 = vunpack.c.l.b16 %v18
  %v50 = vunpack.c.l.b16 %v19
  %v51 = vunpack.c.l.b16 %v20
  %v52 = vunpack.c.l.b16 %v21
  %v53 = vpack.c.b16 %v50, %v49
  %v54 = vpack.c.b16 %v52, %v51
  %v73 = vunpack.c.l.b16 %v22
  %v74 = vunpack.c.l.b16 %v23
  %v75 = vunpack.c.l.b16 %v24
  %v76 = vunpack.c.l.b16 %v25
  %v77 = vunpack.c.l.b16 %v26
  %v78 = vunpack.c.l.b16 %v27
  %v79 = vunpack.c.l.b16 %v28
  %v80 = vunpack.c.l.b16 %v29
  %v81 = vunpack.c.l.b16 %v30
  %v82 = vunpack.c.l.b16 %v31
  %v83 = vunpack.c.l.b16 %v32
  %v84 = vunpack.c.l.b16 %v33
  %v85 = vunpack.c.l.b16 %v34
  %v86 = vunpack.c.l.b16 %v35
  %v87 = vunpack.c.l.b16 %v36
  %v88 = vunpack.c.l.b16 %v37
  %v89 = vpack.c.b16 %v74, %v73
  %v90 = vpack.c.b16 %v76, %v75
  %v91 = vpack.c.b16 %v78, %v77
  %v92 = vpack.c.b16 %v80, %v79
  %v93 = vpack.c.b16 %v82, %v81
  %v94 = vpack.c.b16 %v84, %v83
  %v95 = vpack.c.b16 %v86, %v85
  %v96 = vpack.c.b16 %v88, %v87
  %105 = vmatprep.subr.bf16.mxu0 0
  %106 = vmatpush1.bf16.msra.mxu0 %v96
  %107 = vmatprep.subr.bf16.mxu0 0
  %108 = vmatpush1.bf16.msra.mxu0 %v95
  %109 = vmatprep.subr.bf16.mxu0 0
  %110 = vmatpush1.bf16.msra.mxu0 %v94
  %111 = vmatprep.subr.bf16.mxu0 0
  %112 = vmatpush1.bf16.msra.mxu0 %v93
  %113 = vmatprep.subr.bf16.mxu0 0
  %114 = vmatpush1.bf16.msra.mxu0 %v92
  %115 = vmatprep.subr.bf16.mxu0 0
  %116 = vmatpush1.bf16.msra.mxu0 %v91
  %117 = vmatprep.subr.bf16.mxu0 0
  %118 = vmatpush1.bf16.msra.mxu0 %v90
  %119 = vmatprep.subr.bf16.mxu0 0
  %120 = vmatpush1.bf16.msra.mxu0 %v89
  %121 = vmatprep.subr.bf16.mxu0 0
  %122 = vmatpush2.bf16.msra.mxu0 0
  %123 = vmatprep.subr.bf16.mxu0 0
  %124 = vmatpush2.bf16.msra.mxu0 0
  %125 = vmatprep.subr.bf16.mxu0 0
  %126 = vmatpush2.bf16.msra.mxu0 0
  %127 = vmatprep.subr.bf16.mxu0 0
  %128 = vmatpush2.bf16.msra.mxu0 0
  %129 = vmatprep.subr.bf16.mxu0 0
  %130 = vmatpush2.bf16.msra.mxu0 0
  %131 = vmatprep.subr.bf16.mxu0 0
  %132 = vmatpush2.bf16.msra.mxu0 0
  %133 = vmatprep.subr.bf16.mxu0 0
  %134 = vmatpush2.bf16.msra.mxu0 0
  %135 = vmatprep.subr.bf16.mxu0 0
  %136 = vmatpush2.bf16.msra.mxu0 0
  %137 = vmatprep.mubr.bf16.mxu0 0
  %138 = vmatmul.mubr.bf16.gmra.mxu0 %v53
  %v139 = vpop.f32.mrf.mxu0
  %v140 = vadd.f32 %v43, %v139
  %v141 = vpop.f32.mrf.mxu0
  %v142 = vpop.f32.mrf.mxu0
  %v143 = vadd.f32 %v43, %v142
  %v144 = vpop.f32.mrf.mxu0
  %145 = vmatprep.mubr.bf16.mxu0 0
  %146 = vmatmul.mubr.bf16.gmra.mxu0 %v54
  %v147 = vpop.f32.mrf.mxu0
  %v148 = vadd.f32 %v43, %v147
  %v149 = vpop.f32.mrf.mxu0
  %v150 = vpop.f32.mrf.mxu0
  %v151 = vadd.f32 %v43, %v150
  %v152 = vpop.f32.mrf.mxu0
  %153 = vdwg.mxu0
  %154 = vst [vmem:[%s3] sm:$0xff] %v140
  %155 = vst [vmem:[%s3 + $0x8] sm:$0xff] %v143
  %156 = vst [vmem:[%s3 + $0x10] sm:$0xff] %v148
  %157 = vst [vmem:[%s3 + $0x18] sm:$0xff] %v151
  %p158 = scmp.eq.s32.totalorder 0, 0
  // Predicated region
  $region14: #{discriminator_forward.9} parent=0 // pred_check
    %p159 = pneg %p158
  $region15: #{discriminator_forward.9} parent=0 // pred_check_branch
    %161 = sbr.rel (%p159) target = $region17
  $region16: #{discriminator_forward.9} parent=0 // pred_region
    %162 = vst [vmem:[%s4] sm:$0x1] 0.0
    %163 = vst [vmem:[%s5] sm:$0x1] 0.0
  $region17: #{discriminator_forward.9} parent=0 // pred_fallthru
    _
  %v164 = vld [vmem:[%s4] sm:$0x1]
  %v165 = vadd.f32 %v140, %v143
  %v166 = vadd.f32 %v165, %v148
  %v167 = vadd.f32 %v166, %v151
  %v168 = vrot.slane %v167, 4
  %v169 = vadd.f32 %v167, %v168
  %v170 = vrot.slane %v169, 2
  %v171 = vadd.f32 %v169, %v170
  %v172 = vrot.slane %v171, 1
  %v173 = vadd.f32 %v171, %v172
  %v174 = vadd.f32 %v164, %v173
  %175 = vst [vmem:[%s4] sm:$0x1] %v174
  %v176 = vld [vmem:[%s5] sm:$0x1]
  %v177 = vmul.f32 %v140, %v140
  %v178 = vmul.f32 %v143, %v143
  %v179 = vmul.f32 %v148, %v148
  %v180 = vmul.f32 %v151, %v151
  %v181 = vadd.f32 %v177, %v178
  %v182 = vadd.f32 %v181, %v179
  %v183 = vadd.f32 %v182, %v180
  %v184 = vrot.slane %v183, 4
  %v185 = vadd.f32 %v183, %v184
  %v186 = vrot.slane %v185, 2
  %v187 = vadd.f32 %v185, %v186
  %v188 = vrot.slane %v187, 1
  %v189 = vadd.f32 %v187, %v188
  %v190 = vadd.f32 %v176, %v189
  %191 = vst [vmem:[%s5] sm:$0x1] %v190
  // Predicated region
  $region18: #{discriminator_forward.9} parent=0 // pred_check
    _
  $region19: #{discriminator_forward.9} parent=0 // pred_check_branch
    %193 = sbr.rel (0) target = $region21
  $region20: #{discriminator_forward.9} parent=0 // pred_region
    _
  $region21: #{discriminator_forward.9} parent=0 // pred_fallthru
    _
  // Predicated region
  $region22: #{discriminator_forward.9} parent=0 // pred_check
    _
  $region23: #{discriminator_forward.9} parent=0 // pred_check_branch
    %195 = sbr.rel (0) target = $region25
  $region24: #{discriminator_forward.9} parent=0 // pred_region
    _
  $region25: #{discriminator_forward.9} parent=0 // pred_fallthru
    _
  // Predicated region
  $region26: #{discriminator_forward.9} parent=0 // pred_check
    _
  $region27: #{discriminator_forward.9} parent=0 // pred_check_branch
    %197 = sbr.rel (0) target = $region29
  $region28: #{discriminator_forward.9} parent=0 // pred_region
    _
  $region29: #{discriminator_forward.9} parent=0 // pred_fallthru
    _
  // Predicated region
  $region30: #{discriminator_forward.9} parent=0 // pred_check
    _
  $region31: #{discriminator_forward.9} parent=0 // pred_check_branch
    %199 = sbr.rel (0) target = $region33
  $region32: #{discriminator_forward.9} parent=0 // pred_region
    _
  $region33: #{discriminator_forward.9} parent=0 // pred_fallthru
    _
  // Predicated region
  $region34: #{discriminator_forward.9} parent=0 // pred_check
    _
  $region35: #{discriminator_forward.9} parent=0 // pred_check_branch
    %201 = sbr.rel (0) target = $region37
  $region36: #{discriminator_forward.9} parent=0 // pred_region
    _
  $region37: #{discriminator_forward.9} parent=0 // pred_fallthru
    _
  // Predicated region
  $region38: #{discriminator_forward.9} parent=0 // pred_check
    _
  $region39: #{discriminator_forward.9} parent=0 // pred_check_branch
    %203 = sbr.rel (0) target = $region41
  $region40: #{discriminator_forward.9} parent=0 // pred_region
    _
  $region41: #{discriminator_forward.9} parent=0 // pred_fallthru
    _

// kernel: discriminator_forward.10
$region0: #{discriminator_forward.10}
  #allocation0 [shape = 'u32[]', space=smem, size = 0x4, offset = 0x4, fixed_abs, tag = 'smem constant byte address 0x4 - core index']
  #allocation1 [shape = 'u32[144,128]{1,0:T(1,128)}', space=vmem, size = 0x12000, scoped, tag = 'internal scratch']
  %s0 = inlined_call_operand.vmem [shape: f32[32,128], index: 0, kind: input, shape index: {}]
  %s1 = inlined_call_operand.vmem [shape: f32[1,128], index: 1, kind: input, shape index: {}]
  %s2 = inlined_call_operand.vmem [shape: f32[1,128], index: 2, kind: input, shape index: {}]
  %s3 = inlined_call_operand.vmem [shape: f32[1,128], index: 3, kind: input, shape index: {}]
  %s4 = inlined_call_operand.vmem [shape: f32[1,128], index: 4, kind: input, shape index: {}]
  %s5 = inlined_call_operand.vmem [shape: bf16[32,128], index: 5, kind: output, shape index: {}]
  %s6 = sld [smem:[#allocation0]]
  $region30: #{discriminator_forward.10} parent=0
    _
  %s8 = ssub.s32 1, %s6
  %s9 = scalar_select 0, %s8, %s6
  // Predicated region
  $region2: #{discriminator_forward.10} parent=0 // pred_check
    _
  $region3: #{discriminator_forward.10} parent=0 // pred_check_branch
    %11 = sbr.rel (0) target = $region5
  $region4: #{discriminator_forward.10} parent=0 // pred_region
    _
  $region5: #{discriminator_forward.10} parent=0 // pred_fallthru
    _
  // Predicated region
  $region6: #{discriminator_forward.10} parent=0 // pred_check
    _
  $region7: #{discriminator_forward.10} parent=0 // pred_check_branch
    %13 = sbr.rel (0) target = $region9
  $region8: #{discriminator_forward.10} parent=0 // pred_region
    _
  $region9: #{discriminator_forward.10} parent=0 // pred_fallthru
    _
  // Predicated region
  $region10: #{discriminator_forward.10} parent=0 // pred_check
    _
  $region11: #{discriminator_forward.10} parent=0 // pred_check_branch
    %15 = sbr.rel (0) target = $region13
  $region12: #{discriminator_forward.10} parent=0 // pred_region
    _
  $region13: #{discriminator_forward.10} parent=0 // pred_fallthru
    _
  // Predicated region
  $region14: #{discriminator_forward.10} parent=0 // pred_check
    _
  $region15: #{discriminator_forward.10} parent=0 // pred_check_branch
    %17 = sbr.rel (0) target = $region17
  $region16: #{discriminator_forward.10} parent=0 // pred_region
    _
  $region17: #{discriminator_forward.10} parent=0 // pred_fallthru
    _
  // Predicated region
  $region18: #{discriminator_forward.10} parent=0 // pred_check
    _
  $region19: #{discriminator_forward.10} parent=0 // pred_check_branch
    %19 = sbr.rel (0) target = $region21
  $region20: #{discriminator_forward.10} parent=0 // pred_region
    _
  $region21: #{discriminator_forward.10} parent=0 // pred_fallthru
    _
  %v20 = vld [vmem:[%s1] sm:$0x1]
  %v21 = vmul.f32 %v20, 0.03125
  %v22 = vld [vmem:[%s2] sm:$0x1]
  %v23 = vmul.f32 %v22, 0.03125
  %v24 = vmul.f32 %v21, %v21
  %v25 = vsub.f32 %v23, %v24
  %v26 = vmax.f32 %v25, 0.0
  %v27 = vld [vmem:[%s0] sm:$0xff]
  %v28 = vld [vmem:[%s0 + $0x8] sm:$0xff]
  %v29 = vld [vmem:[%s0 + $0x10] sm:$0xff]
  %v30 = vld [vmem:[%s0 + $0x18] sm:$0xff]
  %v32 = vlaneseq
  %v33 = vshrl.u32 %v32, 7
  %v34 = vsub.s32 0, %v33
  %v35 = vrot.slane %v21, %v34
  %v37 = vsub.f32 %v27, %v35
  %v38 = vsub.f32 %v28, %v35
  %v39 = vsub.f32 %v29, %v35
  %v40 = vsub.f32 %v30, %v35
  %v41 = vadd.f32 %v26, 1e-05
  %v42 = vrsqrt.pop %v41
  %v44 = vlaneseq
  %v45 = vshrl.u32 %v44, 7
  %v46 = vsub.s32 0, %v45
  %v47 = vrot.slane %v42, %v46
  %v49 = vmul.f32 %v37, %v47
  %v50 = vmul.f32 %v38, %v47
  %v51 = vmul.f32 %v39, %v47
  %v52 = vmul.f32 %v40, %v47
  %v53 = vld [vmem:[%s3] sm:$0x1]
  %v55 = vlaneseq
  %v56 = vshrl.u32 %v55, 7
  %v57 = vsub.s32 0, %v56
  %v58 = vrot.slane %v53, %v57
  %v60 = vmul.f32 %v58, %v49
  %v61 = vmul.f32 %v58, %v50
  %v62 = vmul.f32 %v58, %v51
  %v63 = vmul.f32 %v58, %v52
  %v64 = vld [vmem:[%s4] sm:$0x1]
  %v66 = vlaneseq
  %v67 = vshrl.u32 %v66, 7
  %v68 = vsub.s32 0, %v67
  %v69 = vrot.slane %v64, %v68
  %v71 = vadd.f32 %v60, %v69
  %v72 = vadd.f32 %v61, %v69
  %v73 = vadd.f32 %v62, %v69
  %v74 = vadd.f32 %v63, %v69
  %vm75 = vcmp.gt.f32.partialorder %v71, 0.0
  %vm76 = vcmp.gt.f32.partialorder %v72, 0.0
  %vm77 = vcmp.gt.f32.partialorder %v73, 0.0
  %vm78 = vcmp.gt.f32.partialorder %v74, 0.0
  %v79 = vmul.f32 %v71, 0.2
  %v80 = vmul.f32 %v72, 0.2
  %v81 = vmul.f32 %v73, 0.2
  %v82 = vmul.f32 %v74, 0.2
  %v83 = vsel %vm75, %v71, %v79
  %v84 = vsel %vm76, %v72, %v80
  %v85 = vsel %vm77, %v73, %v81
  %v86 = vsel %vm78, %v74, %v82
  %v87 = vpack.c.bf16 %v84, %v83
  %v88 = vpack.c.bf16 %v86, %v85
  %v91 = vunpack.c.l.b16 %v87
  %v92 = vunpack.c.h.b16 %v87
  %v93 = vunpack.c.l.b16 %v88
  %v94 = vunpack.c.h.b16 %v88
  %v95 = vpack.c.b16 %v91, %v91
  %v96 = vpack.c.b16 %v92, %v92
  %v97 = vpack.c.b16 %v93, %v93
  %v98 = vpack.c.b16 %v94, %v94
  %103 = vst [vmem:[%s5] sm:$0xf] %v95
  %104 = vst [vmem:[%s5 + $0x4] sm:$0xf] %v96
  %105 = vst [vmem:[%s5 + $0x8] sm:$0xf] %v97
  %106 = vst [vmem:[%s5 + $0xc] sm:$0xf] %v98
  // Predicated region
  $region22: #{discriminator_forward.10} parent=0 // pred_check
    _
  $region23: #{discriminator_forward.10} parent=0 // pred_check_branch
    %108 = sbr.rel (0) target = $region25
  $region24: #{discriminator_forward.10} parent=0 // pred_region
    _
  $region25: #{discriminator_forward.10} parent=0 // pred_fallthru
    _
  // Predicated region
  $region26: #{discriminator_forward.10} parent=0 // pred_check
    _
  $region27: #{discriminator_forward.10} parent=0 // pred_check_branch
    %110 = sbr.rel (0) target = $region29
  $region28: #{discriminator_forward.10} parent=0 // pred_region
    _
  $region29: #{discriminator_forward.10} parent=0 // pred_fallthru
    _

// kernel: discriminator_forward.12
$region0: #{discriminator_forward.12}
  #allocation0 [shape = 'u32[]', space=smem, size = 0x4, offset = 0x4, fixed_abs, tag = 'smem constant byte address 0x4 - core index']
  #allocation1 [shape = 'u32[144,128]{1,0:T(1,128)}', space=vmem, size = 0x12000, scoped, tag = 'internal scratch']
  %s0 = inlined_call_operand.vmem [shape: f32[2,4,128], index: 0, kind: input, shape index: {}]
  %s1 = inlined_call_operand.vmem [shape: f32[1,128], index: 1, kind: input, shape index: {}]
  %s2 = inlined_call_operand.vmem [shape: f32[1,128], index: 2, kind: input, shape index: {}]
  %s3 = inlined_call_operand.vmem [shape: f32[1,128], index: 3, kind: input, shape index: {}]
  %s4 = inlined_call_operand.vmem [shape: f32[1,128], index: 4, kind: input, shape index: {}]
  %s5 = inlined_call_operand.vmem [shape: f32[2,1,128], index: 5, kind: output, shape index: {}]
  %s6 = sld [smem:[#allocation0]]
  $region53: #{discriminator_forward.12} parent=0
    _
  %s8 = ssub.s32 1, %s6
  %s9 = scalar_select 0, %s8, %s6
  loop: start=0, step=1, limit=4
  $region2: #{discriminator_forward.12} parent=0 // loop_pre_header
    _
  $region3: #{discriminator_forward.12} parent=0 // loop_header
    %s11 = sphi 0, %s15
    %p12 = scmp.ge.s32.totalorder %s11, 4
    %s21 = sphi 0, %s23
    %s24 = sphi 0, %s21
    %s25 = sphi 0, %s24
    %s41 = sphi 0, %s25
    %s45 = sphi 0, %s45
    %s47 = sphi 0, %s45
    %s48 = sphi 0, %s47
    %s62 = sphi 0, %s48
    %s66 = sphi 0, %s66
    %s68 = sphi 0, %s66
    %s69 = sphi 0, %s68
    %s83 = sphi 0, %s69
    %s87 = sphi 0, %s87
    %s89 = sphi 0, %s87
    %s90 = sphi 0, %s89
    %s104 = sphi 0, %s90
    %s108 = sphi 0, %s108
    %s110 = sphi 0, %s108
    %s111 = sphi 0, %s110
    %s125 = sphi 0, %s111
    %s131 = sphi 0, %s133
    %s134 = sphi 0, %s131
    %s135 = sphi 0, %s134
    %s151 = sphi 0, %s135
  $region4: #{discriminator_forward.12} parent=0 // loop_header_branch
    %14 = sbr.rel (%p12) target = $region8
  $region5: #{discriminator_forward.12} parent=0 // loop_body
    %s16 = ssub.s32 %s11, 1
    %s17 = ssub.s32 %s11, 2
    %s18 = sadd.s32 %s11, 1
    %s19 = ssub.s32 %s11, %s18
    %p20 = scmp.eq.s32.totalorder %s19, 0
    %s22 = sadd.s32 %s21, 1
    %s23 = scalar_select %p20, %s21, %s22
    %p26 = pneg %p20
    %p27 = scmp.eq.s32.totalorder %s11, 1
    %p28 = por %p26, %p27
    %p29 = scmp.ne.s32.totalorder %s21, %s24
    %p30 = scmp.eq.s32.totalorder %s11, 0
    %p31 = por %p29, %p30
    %p32 = scmp.ne.s32.totalorder %s21, %s24
    %p33 = scmp.eq.s32.totalorder %s16, 1
    %p34 = por %p32, %p33
    %p35 = scmp.ne.s32.totalorder %s24, %s25
    %p36 = scmp.eq.s32.totalorder %s16, 0
    %p37 = por %p35, %p36
    %p38 = scmp.ne.s32.totalorder %s24, %s25
    %p39 = scmp.eq.s32.totalorder %s17, 1
    %p40 = por %p38, %p39
    %p42 = scmp.ne.s32.totalorder %s25, %s41
    %p43 = scmp.eq.s32.totalorder %s17, 0
    %p44 = por %p42, %p43
    %s46 = sadd.s32 %s45, 1
    %p49 = scmp.eq.s32.totalorder %s11, 1
    %p50 = scmp.ne.s32.totalorder %s45, %s47
    %p51 = scmp.eq.s32.totalorder %s11, 0
    %p52 = por %p50, %p51
    %p53 = scmp.ne.s32.totalorder %s45, %s47
    %p54 = scmp.eq.s32.totalorder %s16, 1
    %p55 = por %p53, %p54
    %p56 = scmp.ne.s32.totalorder %s47, %s48
    %p57 = scmp.eq.s32.totalorder %s16, 0
    %p58 = por %p56, %p57
    %p59 = scmp.ne.s32.totalorder %s47, %s48
    %p60 = scmp.eq.s32.totalorder %s17, 1
    %p61 = por %p59, %p60
    %p63 = scmp.ne.s32.totalorder %s48, %s62
    %p64 = scmp.eq.s32.totalorder %s17, 0
    %p65 = por %p63, %p64
    %s67 = sadd.s32 %s66, 1
    %p70 = scmp.eq.s32.totalorder %s11, 1
    %p71 = scmp.ne.s32.totalorder %s66, %s68
    %p72 = scmp.eq.s32.totalorder %s11, 0
    %p73 = por %p71, %p72
    %p74 = scmp.ne.s32.totalorder %s66, %s68
    %p75 = scmp.eq.s32.totalorder %s16, 1
    %p76 = por %p74, %p75
    %p77 = scmp.ne.s32.totalorder %s68, %s69
    %p78 = scmp.eq.s32.totalorder %s16, 0
    %p79 = por %p77, %p78
    %p80 = scmp.ne.s32.totalorder %s68, %s69
    %p81 = scmp.eq.s32.totalorder %s17, 1
    %p82 = por %p80, %p81
    %p84 = scmp.ne.s32.totalorder %s69, %s83
    %p85 = scmp.eq.s32.totalorder %s17, 0
    %p86 = por %p84, %p85
    %s88 = sadd.s32 %s87, 1
    %p91 = scmp.eq.s32.totalorder %s11, 1
    %p92 = scmp.ne.s32.totalorder %s87, %s89
    %p93 = scmp.eq.s32.totalorder %s11, 0
    %p94 = por %p92, %p93
    %p95 = scmp.ne.s32.totalorder %s87, %s89
    %p96 = scmp.eq.s32.totalorder %s16, 1
    %p97 = por %p95, %p96
    %p98 = scmp.ne.s32.totalorder %s89, %s90
    %p99 = scmp.eq.s32.totalorder %s16, 0
    %p100 = por %p98, %p99
    %p101 = scmp.ne.s32.totalorder %s89, %s90
    %p102 = scmp.eq.s32.totalorder %s17, 1
    %p103 = por %p101, %p102
    %p105 = scmp.ne.s32.totalorder %s90, %s104
    %p106 = scmp.eq.s32.totalorder %s17, 0
    %p107 = por %p105, %p106
    %s109 = sadd.s32 %s108, 1
    %p112 = scmp.eq.s32.totalorder %s11, 1
    %p113 = scmp.ne.s32.totalorder %s108, %s110
    %p114 = scmp.eq.s32.totalorder %s11, 0
    %p115 = por %p113, %p114
    %p116 = scmp.ne.s32.totalorder %s108, %s110
    %p117 = scmp.eq.s32.totalorder %s16, 1
    %p118 = por %p116, %p117
    %p119 = scmp.ne.s32.totalorder %s110, %s111
    %p120 = scmp.eq.s32.totalorder %s16, 0
    %p121 = por %p119, %p120
    %p122 = scmp.ne.s32.totalorder %s110, %s111
    %p123 = scmp.eq.s32.totalorder %s17, 1
    %p124 = por %p122, %p123
    %p126 = scmp.ne.s32.totalorder %s111, %s125
    %p127 = scmp.eq.s32.totalorder %s17, 0
    %p128 = por %p126, %p127
    %s129 = ssub.s32 %s11, %s18
    %p130 = scmp.eq.s32.totalorder %s129, 0
    %s132 = sadd.s32 %s131, 1
    %s133 = scalar_select %p130, %s131, %s132
    %p136 = pneg %p130
    %p137 = scmp.eq.s32.totalorder %s11, 1
    %p138 = por %p136, %p137
    %p139 = scmp.ne.s32.totalorder %s131, %s134
    %p140 = scmp.eq.s32.totalorder %s11, 0
    %p141 = por %p139, %p140
    %p142 = scmp.ne.s32.totalorder %s131, %s134
    %p143 = scmp.eq.s32.totalorder %s16, 1
    %p144 = por %p142, %p143
    %p145 = scmp.ne.s32.totalorder %s134, %s135
    %p146 = scmp.eq.s32.totalorder %s16, 0
    %p147 = por %p145, %p146
    %p148 = scmp.ne.s32.totalorder %s134, %s135
    %p149 = scmp.eq.s32.totalorder %s17, 1
    %p150 = por %p148, %p149
    %p152 = scmp.ne.s32.totalorder %s135, %s151
    %p153 = scmp.eq.s32.totalorder %s17, 0
    %p154 = por %p152, %p153
    %p155 = scmp.le.s32.totalorder 1, %s11
    %p156 = scmp.lt.s32.totalorder %s11, 3
    %p157 = pnand %p155, %p156
    %p158 = pneg %p157
    // Predicated region
    $region9: #{discriminator_forward.12} parent=5 // pred_check
      _
    $region10: #{discriminator_forward.12} parent=5 // pred_check_branch
      %160 = sbr.rel (%p157) target = $region12
    $region11: #{discriminator_forward.12} parent=5 // pred_region
      %s161 = ssub.s32 %s11, 1
      // Predicated region
      $region13: #{discriminator_forward.12} parent=11 // pred_check
        %p162 = pneg %p58
      $region14: #{discriminator_forward.12} parent=11 // pred_check_branch
        %164 = sbr.rel (%p162) target = $region16
      $region15: #{discriminator_forward.12} parent=11 // pred_region
        _
      $region16: #{discriminator_forward.12} parent=11 // pred_fallthru
        _
      // Predicated region
      $region17: #{discriminator_forward.12} parent=11 // pred_check
        %p165 = pneg %p79
      $region18: #{discriminator_forward.12} parent=11 // pred_check_branch
        %167 = sbr.rel (%p165) target = $region20
      $region19: #{discriminator_forward.12} parent=11 // pred_region
        _
      $region20: #{discriminator_forward.12} parent=11 // pred_fallthru
        _
      // Predicated region
      $region21: #{discriminator_forward.12} parent=11 // pred_check
        %p168 = pneg %p100
      $region22: #{discriminator_forward.12} parent=11 // pred_check_branch
        %170 = sbr.rel (%p168) target = $region24
      $region23: #{discriminator_forward.12} parent=11 // pred_region
        _
      $region24: #{discriminator_forward.12} parent=11 // pred_fallthru
        _
      // Predicated region
      $region25: #{discriminator_forward.12} parent=11 // pred_check
        %p171 = pneg %p121
      $region26: #{discriminator_forward.12} parent=11 // pred_check_branch
        %173 = sbr.rel (%p171) target = $region28
      $region27: #{discriminator_forward.12} parent=11 // pred_region
        _
      $region28: #{discriminator_forward.12} parent=11 // pred_fallthru
        _
    $region12: #{discriminator_forward.12} parent=5 // pred_fallthru
      _
    %p174 = scmp.lt.s32.totalorder %s11, 2
    // Predicated region
    $region29: #{discriminator_forward.12} parent=5 // pred_check
      %p175 = pneg %p174
    $region30: #{discriminator_forward.12} parent=5 // pred_check_branch
      %177 = sbr.rel (%p175) target = $region32
    $region31: #{discriminator_forward.12} parent=5 // pred_region
      // Predicated region
      $region33: #{discriminator_forward.12} parent=31 // pred_check
        %p178 = pneg %p31
      $region34: #{discriminator_forward.12} parent=31 // pred_check_branch
        %180 = sbr.rel (%p178) target = $region36
      $region35: #{discriminator_forward.12} parent=31 // pred_region
        %p181 = scmp.lt.s32.totalorder %s11, 1
        %s182 = scalar_select %p181, %s11, 1
        %s183 = smul.addr %s182, 4
        %s184 = scalar_lea.vmem %s0, %s183
      $region36: #{discriminator_forward.12} parent=31 // pred_fallthru
        _
    $region32: #{discriminator_forward.12} parent=5 // pred_fallthru
      _
    %p185 = scmp.le.s32.totalorder 1, %s11
    %p186 = scmp.lt.s32.totalorder %s11, 3
    %p187 = pnand %p185, %p186
    %p188 = pneg %p187
    // Predicated region
    $region37: #{discriminator_forward.12} parent=5 // pred_check
      _
    $region38: #{discriminator_forward.12} parent=5 // pred_check_branch
      %190 = sbr.rel (%p187) target = $region40
    $region39: #{discriminator_forward.12} parent=5 // pred_region
      %s191 = ssub.s32 %s11, 1
      %p192 = scmp.lt.s32.totalorder %s16, 1
      %s193 = scalar_select %p192, %s16, 1
      %s194 = smul.addr %s193, 4
      %s195 = scalar_lea.vmem %s0, %s194
      %p196 = pneg %p37
      %p197 = pneg %p34
      %p198 = pneg %p58
      %p199 = pneg %p55
      %p200 = pneg %p79
      %p201 = pneg %p76
      %p202 = pneg %p100
      %p203 = pneg %p97
      %p204 = pneg %p121
      %p205 = pneg %p118
      %p206 = pneg %p147
      %p207 = pneg %p144
      %p208 = scmp.lt.s32.totalorder %s16, 1
      %s209 = scalar_select %p208, %s16, 1
      %s210 = scalar_lea.vmem %s5, %s209
      %p211 = scmp.lt.s32.totalorder %s16, 1
      %s212 = scalar_select %p211, %s16, 1
      %s213 = smul.addr %s212, 4
      %s214 = scalar_lea.vmem %s0, %s213
      %p215 = scmp.lt.s32.totalorder %s16, 1
      %s216 = scalar_select %p215, %s16, 1
      %s217 = scalar_lea.vmem %s5, %s216
      %v218 = vld [vmem:[%s1] sm:$0x1]
      %v219 = vmul.f32 %v218, 0.125
      %v220 = vld [vmem:[%s2] sm:$0x1]
      %v221 = vmul.f32 %v220, 0.125
      %v222 = vmul.f32 %v219, %v219
      %v223 = vsub.f32 %v221, %v222
      %v224 = vmax.f32 %v223, 0.0
      %v225 = vld [vmem:[%s214] sm:$0xf]
      %v227 = vlaneseq
      %v228 = vshrl.u32 %v227, 7
      %v229 = vsub.s32 0, %v228
      %v230 = vrot.slane %v219, %v229
      %v232 = vsub.f32 %v225, %v230
      %v233 = vadd.f32 %v224, 1e-05
      %v234 = vrsqrt.pop %v233
      %v236 = vlaneseq
      %v237 = vshrl.u32 %v236, 7
      %v238 = vsub.s32 0, %v237
      %v239 = vrot.slane %v234, %v238
      %v241 = vmul.f32 %v232, %v239
      %v242 = vld [vmem:[%s3] sm:$0x1]
      %v244 = vlaneseq
      %v245 = vshrl.u32 %v244, 7
      %v246 = vsub.s32 0, %v245
      %v247 = vrot.slane %v242, %v246
      %v249 = vmul.f32 %v247, %v241
      %v250 = vld [vmem:[%s4] sm:$0x1]
      %v252 = vlaneseq
      %v253 = vshrl.u32 %v252, 7
      %v254 = vsub.s32 0, %v253
      %v255 = vrot.slane %v250, %v254
      %v257 = vadd.f32 %v249, %v255
      %vm258 = vcmp.gt.f32.partialorder %v257, 0.0
      %v259 = vmul.f32 %v257, 0.2
      %v260 = vsel %vm258, %v257, %v259
      %vm261 = vcmask 1043456
      %v262 = vsel %vm261, %v260, 0.0
      %v263 = vrot.slane %v262, 4
      %v264 = vadd.f32 %v262, %v263
      %v265 = vrot.slane %v264, 2
      %v266 = vadd.f32 %v264, %v265
      %v267 = vrot.slane %v266, 1
      %v268 = vadd.f32 %v266, %v267
      %269 = vst [vmem:[%s217] sm:$0x1] %v268
      %p270 = scmp.lt.s32.totalorder %s16, 1
      %s271 = scalar_select %p270, %s16, 1
      %s272 = scalar_lea.vmem %s5, %s271
      // Predicated region
      $region41: #{discriminator_forward.12} parent=39 // pred_check
        %p273 = pneg %p144
      $region42: #{discriminator_forward.12} parent=39 // pred_check_branch
        %275 = sbr.rel (%p273) target = $region44
      $region43: #{discriminator_forward.12} parent=39 // pred_region
        _
      $region44: #{discriminator_forward.12} parent=39 // pred_fallthru
        _
    $region40: #{discriminator_forward.12} parent=5 // pred_fallthru
      _
    %p276 = scmp.le.s32.totalorder 2, %s11
    // Predicated region
    $region45: #{discriminator_forward.12} parent=5 // pred_check
      %p277 = pneg %p276
    $region46: #{discriminator_forward.12} parent=5 // pred_check_branch
      %279 = sbr.rel (%p277) target = $region48
    $region47: #{discriminator_forward.12} parent=5 // pred_region
      %s280 = ssub.s32 %s11, 2
      // Predicated region
      $region49: #{discriminator_forward.12} parent=47 // pred_check
        %p281 = pneg %p150
      $region50: #{discriminator_forward.12} parent=47 // pred_check_branch
        %283 = sbr.rel (%p281) target = $region52
      $region51: #{discriminator_forward.12} parent=47 // pred_region
        %p284 = scmp.lt.s32.totalorder %s17, 1
        %s285 = scalar_select %p284, %s17, 1
        %s286 = scalar_lea.vmem %s5, %s285
      $region52: #{discriminator_forward.12} parent=47 // pred_fallthru
        _
    $region48: #{discriminator_forward.12} parent=5 // pred_fallthru
      _
  $region6: #{discriminator_forward.12} parent=0 // loop_footer
    %s15 = sadd.s32 1, %s11
  $region7: #{discriminator_forward.12} parent=0 // loop_footer_branch
    %10 = sbr.rel target = $region3
  $region8: #{discriminator_forward.12} parent=0 // loop_exit
    _

// kernel: discriminator_forward.11
$region0: #{discriminator_forward.11}
  #allocation0 [shape = 'u32[]', space=smem, size = 0x4, offset = 0x4, fixed_abs, tag = 'smem constant byte address 0x4 - core index']
  #allocation1 [shape = 'u32[144,128]{1,0:T(1,128)}', space=vmem, size = 0x12000, scoped, tag = 'internal scratch']
  %s0 = inlined_call_operand.vmem [shape: bf16[8,256], index: 0, kind: input, shape index: {}]
  %s1 = inlined_call_operand.vmem [shape: bf16[256,128], index: 1, kind: input, shape index: {}]
  %s2 = inlined_call_operand.vmem [shape: f32[1,128], index: 2, kind: input, shape index: {}]
  %s3 = inlined_call_operand.vmem [shape: f32[8,128], index: 3, kind: output, shape index: {0}]
  %s4 = inlined_call_operand.vmem [shape: f32[1,128], index: 4, kind: output, shape index: {1}]
  %s5 = inlined_call_operand.vmem [shape: f32[1,128], index: 5, kind: output, shape index: {2}]
  %6 = xla_tuple %s3, %s4, %s5
  %s7 = sld [smem:[#allocation0]]
  $region42: #{discriminator_forward.11} parent=0
    _
  %s9 = ssub.s32 1, %s7
  %s10 = scalar_select 0, %s9, %s7
  // Predicated region
  $region2: #{discriminator_forward.11} parent=0 // pred_check
    _
  $region3: #{discriminator_forward.11} parent=0 // pred_check_branch
    %12 = sbr.rel (0) target = $region5
  $region4: #{discriminator_forward.11} parent=0 // pred_region
    _
  $region5: #{discriminator_forward.11} parent=0 // pred_fallthru
    _
  // Predicated region
  $region6: #{discriminator_forward.11} parent=0 // pred_check
    _
  $region7: #{discriminator_forward.11} parent=0 // pred_check_branch
    %14 = sbr.rel (0) target = $region9
  $region8: #{discriminator_forward.11} parent=0 // pred_region
    _
  $region9: #{discriminator_forward.11} parent=0 // pred_fallthru
    _
  // Predicated region
  $region10: #{discriminator_forward.11} parent=0 // pred_check
    _
  $region11: #{discriminator_forward.11} parent=0 // pred_check_branch
    %16 = sbr.rel (0) target = $region13
  $region12: #{discriminator_forward.11} parent=0 // pred_region
    _
  $region13: #{discriminator_forward.11} parent=0 // pred_fallthru
    _
  %v18 = vld [vmem:[%s0] sm:$0xff]
  %v19 = vld [vmem:[%s1] sm:$0xf]
  %v20 = vld [vmem:[%s1 + $0x4] sm:$0xf]
  %v21 = vld [vmem:[%s1 + $0x8] sm:$0xf]
  %v22 = vld [vmem:[%s1 + $0xc] sm:$0xf]
  %v23 = vld [vmem:[%s1 + $0x10] sm:$0xf]
  %v24 = vld [vmem:[%s1 + $0x14] sm:$0xf]
  %v25 = vld [vmem:[%s1 + $0x18] sm:$0xf]
  %v26 = vld [vmem:[%s1 + $0x1c] sm:$0xf]
  %v27 = vld [vmem:[%s1 + $0x20] sm:$0xf]
  %v28 = vld [vmem:[%s1 + $0x24] sm:$0xf]
  %v29 = vld [vmem:[%s1 + $0x28] sm:$0xf]
  %v30 = vld [vmem:[%s1 + $0x2c] sm:$0xf]
  %v31 = vld [vmem:[%s1 + $0x30] sm:$0xf]
  %v32 = vld [vmem:[%s1 + $0x34] sm:$0xf]
  %v33 = vld [vmem:[%s1 + $0x38] sm:$0xf]
  %v34 = vld [vmem:[%s1 + $0x3c] sm:$0xf]
  %v35 = vld [vmem:[%s1 + $0x40] sm:$0xf]
  %v36 = vld [vmem:[%s1 + $0x44] sm:$0xf]
  %v37 = vld [vmem:[%s1 + $0x48] sm:$0xf]
  %v38 = vld [vmem:[%s1 + $0x4c] sm:$0xf]
  %v39 = vld [vmem:[%s1 + $0x50] sm:$0xf]
  %v40 = vld [vmem:[%s1 + $0x54] sm:$0xf]
  %v41 = vld [vmem:[%s1 + $0x58] sm:$0xf]
  %v42 = vld [vmem:[%s1 + $0x5c] sm:$0xf]
  %v43 = vld [vmem:[%s1 + $0x60] sm:$0xf]
  %v44 = vld [vmem:[%s1 + $0x64] sm:$0xf]
  %v45 = vld [vmem:[%s1 + $0x68] sm:$0xf]
  %v46 = vld [vmem:[%s1 + $0x6c] sm:$0xf]
  %v47 = vld [vmem:[%s1 + $0x70] sm:$0xf]
  %v48 = vld [vmem:[%s1 + $0x74] sm:$0xf]
  %v49 = vld [vmem:[%s1 + $0x78] sm:$0xf]
  %v50 = vld [vmem:[%s1 + $0x7c] sm:$0xf]
  %v51 = vld [vmem:[%s2] sm:$0x1]
  %v53 = vlaneseq
  %v54 = vshrl.u32 %v53, 7
  %v55 = vsub.s32 0, %v54
  %v56 = vrot.slane %v51, %v55
  %v59 = vunpack.c.l.b16 %v18
  %v60 = vunpack.c.h.b16 %v18
  %v61 = vpack.c.b16 %v59, %v59
  %v62 = vpack.c.b16 %v60, %v60
  %v97 = vunpack.c.l.b16 %v19
  %v98 = vunpack.c.l.b16 %v20
  %v99 = vunpack.c.l.b16 %v21
  %v100 = vunpack.c.l.b16 %v22
  %v101 = vunpack.c.l.b16 %v23
  %v102 = vunpack.c.l.b16 %v24
  %v103 = vunpack.c.l.b16 %v25
  %v104 = vunpack.c.l.b16 %v26
  %v105 = vunpack.c.l.b16 %v27
  %v106 = vunpack.c.l.b16 %v28
  %v107 = vunpack.c.l.b16 %v29
  %v108 = vunpack.c.l.b16 %v30
  %v109 = vunpack.c.l.b16 %v31
  %v110 = vunpack.c.l.b16 %v32
  %v111 = vunpack.c.l.b16 %v33
  %v112 = vunpack.c.l.b16 %v34
  %v113 = vunpack.c.l.b16 %v35
  %v114 = vunpack.c.l.b16 %v36
  %v115 = vunpack.c.l.b16 %v37
  %v116 = vunpack.c.l.b16 %v38
  %v117 = vunpack.c.l.b16 %v39
  %v118 = vunpack.c.l.b16 %v40
  %v119 = vunpack.c.l.b16 %v41
  %v120 = vunpack.c.l.b16 %v42
  %v121 = vunpack.c.l.b16 %v43
  %v122 = vunpack.c.l.b16 %v44
  %v123 = vunpack.c.l.b16 %v45
  %v124 = vunpack.c.l.b16 %v46
  %v125 = vunpack.c.l.b16 %v47
  %v126 = vunpack.c.l.b16 %v48
  %v127 = vunpack.c.l.b16 %v49
  %v128 = vunpack.c.l.b16 %v50
  %v129 = vpack.c.b16 %v98, %v97
  %v130 = vpack.c.b16 %v100, %v99
  %v131 = vpack.c.b16 %v102, %v101
  %v132 = vpack.c.b16 %v104, %v103
  %v133 = vpack.c.b16 %v106, %v105
  %v134 = vpack.c.b16 %v108, %v107
  %v135 = vpack.c.b16 %v110, %v109
  %v136 = vpack.c.b16 %v112, %v111
  %v137 = vpack.c.b16 %v114, %v113
  %v138 = vpack.c.b16 %v116, %v115
  %v139 = vpack.c.b16 %v118, %v117
  %v140 = vpack.c.b16 %v120, %v119
  %v141 = vpack.c.b16 %v122, %v121
  %v142 = vpack.c.b16 %v124, %v123
  %v143 = vpack.c.b16 %v126, %v125
  %v144 = vpack.c.b16 %v128, %v127
  %161 = vmatprep.subr.bf16.mxu0 0
  %162 = vmatpush1.bf16.msra.mxu0 %v136
  %163 = vmatprep.subr.bf16.mxu0 0
  %164 = vmatpush1.bf16.msra.mxu0 %v135
  %165 = vmatprep.subr.bf16.mxu0 0
  %166 = vmatpush1.bf16.msra.mxu0 %v134
  %167 = vmatprep.subr.bf16.mxu0 0
  %168 = vmatpush1.bf16.msra.mxu0 %v133
  %169 = vmatprep.subr.bf16.mxu0 0
  %170 = vmatpush1.bf16.msra.mxu0 %v132
  %171 = vmatprep.subr.bf16.mxu0 0
  %172 = vmatpush1.bf16.msra.mxu0 %v131
  %173 = vmatprep.subr.bf16.mxu0 0
  %174 = vmatpush1.bf16.msra.mxu0 %v130
  %175 = vmatprep.subr.bf16.mxu0 0
  %176 = vmatpush1.bf16.msra.mxu0 %v129
  %177 = vmatprep.subr.bf16.mxu0 0
  %178 = vmatpush2.bf16.msra.mxu0 %v144
  %179 = vmatprep.subr.bf16.mxu0 0
  %180 = vmatpush2.bf16.msra.mxu0 %v143
  %181 = vmatprep.subr.bf16.mxu0 0
  %182 = vmatpush2.bf16.msra.mxu0 %v142
  %183 = vmatprep.subr.bf16.mxu0 0
  %184 = vmatpush2.bf16.msra.mxu0 %v141
  %185 = vmatprep.subr.bf16.mxu0 0
  %186 = vmatpush2.bf16.msra.mxu0 %v140
  %187 = vmatprep.subr.bf16.mxu0 0
  %188 = vmatpush2.bf16.msra.mxu0 %v139
  %189 = vmatprep.subr.bf16.mxu0 0
  %190 = vmatpush2.bf16.msra.mxu0 %v138
  %191 = vmatprep.subr.bf16.mxu0 0
  %192 = vmatpush2.bf16.msra.mxu0 %v137
  %193 = vmatprep.mubr.bf16.mxu0 %v62
  %194 = vmatmul.mubr.bf16.gmra.mxu0 %v61
  %v195 = vpop.f32.mrf.mxu0
  %v196 = vadd.f32 %v56, %v195
  %v197 = vpop.f32.mrf.mxu0
  %v198 = vpop.f32.mrf.mxu0
  %v199 = vpop.f32.mrf.mxu0
  %200 = vdwg.mxu0
  %201 = vst [vmem:[%s3] sm:$0xff] %v196
  %p202 = scmp.eq.s32.totalorder 0, 0
  // Predicated region
  $region14: #{discriminator_forward.11} parent=0 // pred_check
    %p203 = pneg %p202
  $region15: #{discriminator_forward.11} parent=0 // pred_check_branch
    %205 = sbr.rel (%p203) target = $region17
  $region16: #{discriminator_forward.11} parent=0 // pred_region
    %206 = vst [vmem:[%s4] sm:$0x1] 0.0
    %207 = vst [vmem:[%s5] sm:$0x1] 0.0
  $region17: #{discriminator_forward.11} parent=0 // pred_fallthru
    _
  %v208 = vld [vmem:[%s4] sm:$0x1]
  %v209 = vrot.slane %v196, 4
  %v210 = vadd.f32 %v196, %v209
  %v211 = vrot.slane %v210, 2
  %v212 = vadd.f32 %v210, %v211
  %v213 = vrot.slane %v212, 1
  %v214 = vadd.f32 %v212, %v213
  %v215 = vadd.f32 %v208, %v214
  %216 = vst [vmem:[%s4] sm:$0x1] %v215
  %v217 = vld [vmem:[%s5] sm:$0x1]
  %v218 = vmul.f32 %v196, %v196
  %v219 = vrot.slane %v218, 4
  %v220 = vadd.f32 %v218, %v219
  %v221 = vrot.slane %v220, 2
  %v222 = vadd.f32 %v220, %v221
  %v223 = vrot.slane %v222, 1
  %v224 = vadd.f32 %v222, %v223
  %v225 = vadd.f32 %v217, %v224
  %226 = vst [vmem:[%s5] sm:$0x1] %v225
  // Predicated region
  $region18: #{discriminator_forward.11} parent=0 // pred_check
    _
  $region19: #{discriminator_forward.11} parent=0 // pred_check_branch
    %228 = sbr.rel (0) target = $region21
  $region20: #{discriminator_forward.11} parent=0 // pred_region
    _
  $region21: #{discriminator_forward.11} parent=0 // pred_fallthru
    _
  // Predicated region
  $region22: #{discriminator_forward.11} parent=0 // pred_check
    _
  $region23: #{discriminator_forward.11} parent=0 // pred_check_branch
    %230 = sbr.rel (0) target = $region25
  $region24: #{discriminator_forward.11} parent=0 // pred_region
    _
  $region25: #{discriminator_forward.11} parent=0 // pred_fallthru
    _
  // Predicated region
  $region26: #{discriminator_forward.11} parent=0 // pred_check
    _
  $region27: #{discriminator_forward.11} parent=0 // pred_check_branch
    %232 = sbr.rel (0) target = $region29
  $region28: #{discriminator_forward.11} parent=0 // pred_region
    _
  $region29: #{discriminator_forward.11} parent=0 // pred_fallthru
    _
  // Predicated region
  $region30: #{discriminator_forward.11} parent=0 // pred_check
    _
  $region31: #{discriminator_forward.11} parent=0 // pred_check_branch
    %234 = sbr.rel (0) target = $region33
  $region32: #{discriminator_forward.11} parent=0 // pred_region
    _
  $region33: #{discriminator_forward.11} parent=0 // pred_fallthru
    _
  // Predicated region
  $region34: #{discriminator_forward.11} parent=0 // pred_check
    _
  $region35: #{discriminator_forward.11} parent=0 // pred_check_branch
    %236 = sbr.rel (0) target = $region37
  $region36: #{discriminator_forward.11} parent=0 // pred_region
    _
  $region37: #{discriminator_forward.11} parent=0 // pred_fallthru
    _
  // Predicated region
  $region38: #{discriminator_forward.11} parent=0 // pred_check
    _
  $region39: #{discriminator_forward.11} parent=0 // pred_check_branch
    %238 = sbr.rel (0) target = $region41
  $region40: #{discriminator_forward.11} parent=0 // pred_region
    _
  $region41: #{discriminator_forward.11} parent=0 // pred_fallthru
    _

// kernel: discriminator_forward.13
$region0: #{discriminator_forward.13}
  #allocation0 [shape = 'u32[]', space=smem, size = 0x4, offset = 0x4, fixed_abs, tag = 'smem constant byte address 0x4 - core index']
  #allocation1 [shape = 'u32[144,128]{1,0:T(1,128)}', space=vmem, size = 0x12000, scoped, tag = 'internal scratch']
  #allocation2 [shape = 's32[1]{0}', space=sflag, size = 0x4, scoped, tag = 'scoped memory for discriminator_forward.13']
  #allocation3 [shape = 'u8[512]{0}', space=smem, size = 0x200, scoped, tag = 'prefetched SMEM operand 0']
  #allocation4 [shape = 'f32[1,1]{1,0:T(1,128)S(1)}', space=vmem, size = 0x200, scoped, tag = 'scoped memory for discriminator_forward.13']
  %s0 = inlined_call_operand.vmem [shape: s32[2], index: 0, kind: input, shape index: {}]
  %s1 = inlined_call_operand.vmem [shape: f32[2,1,128], index: 1, kind: input, shape index: {}]
  %s2 = inlined_call_operand.vmem [shape: f32[1,128], index: 2, kind: input, shape index: {}]
  %s3 = inlined_call_operand.<no memory space> [shape: f32[1,1], index: 3, kind: input, shape index: {}]
  %s4 = inlined_call_operand.vmem [shape: f32[10,128], index: 4, kind: input, shape index: {}]
  %s5 = inlined_call_operand.vmem [shape: f32[1,128], index: 5, kind: input, shape index: {}]
  %s6 = inlined_call_operand.vmem [shape: f32[2,1,1], index: 6, kind: output, shape index: {}]
  %s7 = sld [smem:[#allocation0]]
  $region53: #{discriminator_forward.13} parent=0
    _
  %s9 = ssub.s32 1, %s7
  %s10 = scalar_select 0, %s9, %s7
  %s11 = sshll.u32 %s0, 4
  %s12 = int_to_ptr.vmem [resolvable:$true] %s11
  %14 = dma.vmem_to_smem %s12, 16, [#allocation3], [#allocation2]
  %v15 = vstv %s3
  %16 = vst [vmem:[#allocation4] sm:$0x1] %v15
  %17 = dma.done [#allocation2], 16
  %18 = sfence
  loop: start=0, step=1, limit=4
  $region2: #{discriminator_forward.13} parent=0 // loop_pre_header
    _
  $region3: #{discriminator_forward.13} parent=0 // loop_header
    %s20 = sphi 0, %s24
    %p21 = scmp.ge.s32.totalorder %s20, 4
    %s30 = sphi 0, %s32
    %s33 = sphi 0, %s30
    %s34 = sphi 0, %s33
    %s50 = sphi 0, %s34
    %s54 = sphi 0, %s54
    %s56 = sphi 0, %s54
    %s57 = sphi 0, %s56
    %s71 = sphi 0, %s57
    %s75 = sphi 0, %s75
    %s77 = sphi 0, %s75
    %s78 = sphi 0, %s77
    %s92 = sphi 0, %s78
    %s96 = sphi 0, %s96
    %s98 = sphi 0, %s96
    %s99 = sphi 0, %s98
    %s113 = sphi 0, %s99
    %s117 = sphi 0, %s117
    %s119 = sphi 0, %s117
    %s120 = sphi 0, %s119
    %s134 = sphi 0, %s120
    %s140 = sphi 0, %s142
    %s143 = sphi 0, %s140
    %s144 = sphi 0, %s143
    %s160 = sphi 0, %s144
  $region4: #{discriminator_forward.13} parent=0 // loop_header_branch
    %23 = sbr.rel (%p21) target = $region8
  $region5: #{discriminator_forward.13} parent=0 // loop_body
    %s25 = ssub.s32 %s20, 1
    %s26 = ssub.s32 %s20, 2
    %s27 = sadd.s32 %s20, 1
    %s28 = ssub.s32 %s20, %s27
    %p29 = scmp.eq.s32.totalorder %s28, 0
    %s31 = sadd.s32 %s30, 1
    %s32 = scalar_select %p29, %s30, %s31
    %p35 = pneg %p29
    %p36 = scmp.eq.s32.totalorder %s20, 1
    %p37 = por %p35, %p36
    %p38 = scmp.ne.s32.totalorder %s30, %s33
    %p39 = scmp.eq.s32.totalorder %s20, 0
    %p40 = por %p38, %p39
    %p41 = scmp.ne.s32.totalorder %s30, %s33
    %p42 = scmp.eq.s32.totalorder %s25, 1
    %p43 = por %p41, %p42
    %p44 = scmp.ne.s32.totalorder %s33, %s34
    %p45 = scmp.eq.s32.totalorder %s25, 0
    %p46 = por %p44, %p45
    %p47 = scmp.ne.s32.totalorder %s33, %s34
    %p48 = scmp.eq.s32.totalorder %s26, 1
    %p49 = por %p47, %p48
    %p51 = scmp.ne.s32.totalorder %s34, %s50
    %p52 = scmp.eq.s32.totalorder %s26, 0
    %p53 = por %p51, %p52
    %s55 = sadd.s32 %s54, 1
    %p58 = scmp.eq.s32.totalorder %s20, 1
    %p59 = scmp.ne.s32.totalorder %s54, %s56
    %p60 = scmp.eq.s32.totalorder %s20, 0
    %p61 = por %p59, %p60
    %p62 = scmp.ne.s32.totalorder %s54, %s56
    %p63 = scmp.eq.s32.totalorder %s25, 1
    %p64 = por %p62, %p63
    %p65 = scmp.ne.s32.totalorder %s56, %s57
    %p66 = scmp.eq.s32.totalorder %s25, 0
    %p67 = por %p65, %p66
    %p68 = scmp.ne.s32.totalorder %s56, %s57
    %p69 = scmp.eq.s32.totalorder %s26, 1
    %p70 = por %p68, %p69
    %p72 = scmp.ne.s32.totalorder %s57, %s71
    %p73 = scmp.eq.s32.totalorder %s26, 0
    %p74 = por %p72, %p73
    %s76 = sadd.s32 %s75, 1
    %p79 = scmp.eq.s32.totalorder %s20, 1
    %p80 = scmp.ne.s32.totalorder %s75, %s77
    %p81 = scmp.eq.s32.totalorder %s20, 0
    %p82 = por %p80, %p81
    %p83 = scmp.ne.s32.totalorder %s75, %s77
    %p84 = scmp.eq.s32.totalorder %s25, 1
    %p85 = por %p83, %p84
    %p86 = scmp.ne.s32.totalorder %s77, %s78
    %p87 = scmp.eq.s32.totalorder %s25, 0
    %p88 = por %p86, %p87
    %p89 = scmp.ne.s32.totalorder %s77, %s78
    %p90 = scmp.eq.s32.totalorder %s26, 1
    %p91 = por %p89, %p90
    %p93 = scmp.ne.s32.totalorder %s78, %s92
    %p94 = scmp.eq.s32.totalorder %s26, 0
    %p95 = por %p93, %p94
    %s97 = sadd.s32 %s96, 1
    %p100 = scmp.eq.s32.totalorder %s20, 1
    %p101 = scmp.ne.s32.totalorder %s96, %s98
    %p102 = scmp.eq.s32.totalorder %s20, 0
    %p103 = por %p101, %p102
    %p104 = scmp.ne.s32.totalorder %s96, %s98
    %p105 = scmp.eq.s32.totalorder %s25, 1
    %p106 = por %p104, %p105
    %p107 = scmp.ne.s32.totalorder %s98, %s99
    %p108 = scmp.eq.s32.totalorder %s25, 0
    %p109 = por %p107, %p108
    %p110 = scmp.ne.s32.totalorder %s98, %s99
    %p111 = scmp.eq.s32.totalorder %s26, 1
    %p112 = por %p110, %p111
    %p114 = scmp.ne.s32.totalorder %s99, %s113
    %p115 = scmp.eq.s32.totalorder %s26, 0
    %p116 = por %p114, %p115
    %s118 = sadd.s32 %s117, 1
    %p121 = scmp.eq.s32.totalorder %s20, 1
    %p122 = scmp.ne.s32.totalorder %s117, %s119
    %p123 = scmp.eq.s32.totalorder %s20, 0
    %p124 = por %p122, %p123
    %p125 = scmp.ne.s32.totalorder %s117, %s119
    %p126 = scmp.eq.s32.totalorder %s25, 1
    %p127 = por %p125, %p126
    %p128 = scmp.ne.s32.totalorder %s119, %s120
    %p129 = scmp.eq.s32.totalorder %s25, 0
    %p130 = por %p128, %p129
    %p131 = scmp.ne.s32.totalorder %s119, %s120
    %p132 = scmp.eq.s32.totalorder %s26, 1
    %p133 = por %p131, %p132
    %p135 = scmp.ne.s32.totalorder %s120, %s134
    %p136 = scmp.eq.s32.totalorder %s26, 0
    %p137 = por %p135, %p136
    %s138 = ssub.s32 %s20, %s27
    %p139 = scmp.eq.s32.totalorder %s138, 0
    %s141 = sadd.s32 %s140, 1
    %s142 = scalar_select %p139, %s140, %s141
    %p145 = pneg %p139
    %p146 = scmp.eq.s32.totalorder %s20, 1
    %p147 = por %p145, %p146
    %p148 = scmp.ne.s32.totalorder %s140, %s143
    %p149 = scmp.eq.s32.totalorder %s20, 0
    %p150 = por %p148, %p149
    %p151 = scmp.ne.s32.totalorder %s140, %s143
    %p152 = scmp.eq.s32.totalorder %s25, 1
    %p153 = por %p151, %p152
    %p154 = scmp.ne.s32.totalorder %s143, %s144
    %p155 = scmp.eq.s32.totalorder %s25, 0
    %p156 = por %p154, %p155
    %p157 = scmp.ne.s32.totalorder %s143, %s144
    %p158 = scmp.eq.s32.totalorder %s26, 1
    %p159 = por %p157, %p158
    %p161 = scmp.ne.s32.totalorder %s144, %s160
    %p162 = scmp.eq.s32.totalorder %s26, 0
    %p163 = por %p161, %p162
    %p164 = scmp.le.s32.totalorder 1, %s20
    %p165 = scmp.lt.s32.totalorder %s20, 3
    %p166 = pnand %p164, %p165
    %p167 = pneg %p166
    // Predicated region
    $region9: #{discriminator_forward.13} parent=5 // pred_check
      _
    $region10: #{discriminator_forward.13} parent=5 // pred_check_branch
      %169 = sbr.rel (%p166) target = $region12
    $region11: #{discriminator_forward.13} parent=5 // pred_region
      %s170 = ssub.s32 %s20, 1
      // Predicated region
      $region13: #{discriminator_forward.13} parent=11 // pred_check
        %p171 = pneg %p67
      $region14: #{discriminator_forward.13} parent=11 // pred_check_branch
        %173 = sbr.rel (%p171) target = $region16
      $region15: #{discriminator_forward.13} parent=11 // pred_region
        _
      $region16: #{discriminator_forward.13} parent=11 // pred_fallthru
        _
      // Predicated region
      $region17: #{discriminator_forward.13} parent=11 // pred_check
        %p174 = pneg %p88
      $region18: #{discriminator_forward.13} parent=11 // pred_check_branch
        %176 = sbr.rel (%p174) target = $region20
      $region19: #{discriminator_forward.13} parent=11 // pred_region
        _
      $region20: #{discriminator_forward.13} parent=11 // pred_fallthru
        _
      // Predicated region
      $region21: #{discriminator_forward.13} parent=11 // pred_check
        %p177 = pneg %p109
      $region22: #{discriminator_forward.13} parent=11 // pred_check_branch
        %179 = sbr.rel (%p177) target = $region24
      $region23: #{discriminator_forward.13} parent=11 // pred_region
        _
      $region24: #{discriminator_forward.13} parent=11 // pred_fallthru
        _
      // Predicated region
      $region25: #{discriminator_forward.13} parent=11 // pred_check
        %p180 = pneg %p130
      $region26: #{discriminator_forward.13} parent=11 // pred_check_branch
        %182 = sbr.rel (%p180) target = $region28
      $region27: #{discriminator_forward.13} parent=11 // pred_region
        _
      $region28: #{discriminator_forward.13} parent=11 // pred_fallthru
        _
    $region12: #{discriminator_forward.13} parent=5 // pred_fallthru
      _
    %p183 = scmp.lt.s32.totalorder %s20, 2
    // Predicated region
    $region29: #{discriminator_forward.13} parent=5 // pred_check
      %p184 = pneg %p183
    $region30: #{discriminator_forward.13} parent=5 // pred_check_branch
      %186 = sbr.rel (%p184) target = $region32
    $region31: #{discriminator_forward.13} parent=5 // pred_region
      // Predicated region
      $region33: #{discriminator_forward.13} parent=31 // pred_check
        %p187 = pneg %p40
      $region34: #{discriminator_forward.13} parent=31 // pred_check_branch
        %189 = sbr.rel (%p187) target = $region36
      $region35: #{discriminator_forward.13} parent=31 // pred_region
        %p190 = scmp.lt.s32.totalorder %s20, 1
        %s191 = scalar_select %p190, %s20, 1
        %s192 = scalar_lea.vmem %s1, %s191
      $region36: #{discriminator_forward.13} parent=31 // pred_fallthru
        _
    $region32: #{discriminator_forward.13} parent=5 // pred_fallthru
      _
    %p193 = scmp.le.s32.totalorder 1, %s20
    %p194 = scmp.lt.s32.totalorder %s20, 3
    %p195 = pnand %p193, %p194
    %p196 = pneg %p195
    // Predicated region
    $region37: #{discriminator_forward.13} parent=5 // pred_check
      _
    $region38: #{discriminator_forward.13} parent=5 // pred_check_branch
      %198 = sbr.rel (%p195) target = $region40
    $region39: #{discriminator_forward.13} parent=5 // pred_region
      %s199 = ssub.s32 %s20, 1
      %p200 = scmp.lt.s32.totalorder %s25, 1
      %s201 = scalar_select %p200, %s25, 1
      %s202 = scalar_lea.vmem %s1, %s201
      %p203 = pneg %p46
      %p204 = pneg %p43
      %p205 = pneg %p67
      %p206 = pneg %p64
      %p207 = pneg %p88
      %p208 = pneg %p85
      %p209 = pneg %p109
      %p210 = pneg %p106
      %p211 = pneg %p130
      %p212 = pneg %p127
      %p213 = pneg %p156
      %p214 = pneg %p153
      %p215 = scmp.lt.s32.totalorder %s25, 1
      %s216 = scalar_select %p215, %s25, 1
      %s217 = scalar_lea.vmem %s6, %s216
      %p218 = scmp.lt.s32.totalorder %s25, 1
      %s219 = scalar_select %p218, %s25, 1
      %s220 = scalar_lea.vmem %s1, %s219
      %p221 = scmp.lt.s32.totalorder %s25, 1
      %s222 = scalar_select %p221, %s25, 1
      %s223 = scalar_lea.vmem %s6, %s222
      %v224 = vld [vmem:[%s220] sm:$0x1]
      %v225 = vld [vmem:[%s2] sm:$0x1]
      %v226 = vmul.f32 %v224, %v225
      %vm227 = vcmask 1040384
      %v228 = vsel %vm227, %v226, 0.0
      %229 = vadd.xlane.f32.xlu0 %v228
      %v230 = vpop.xlane.xlu0 %229
      %v231 = vld [vmem:[#allocation4] sm:$0x1]
      %v232 = vadd.f32 %v230, %v231
      %s233 = sld [smem:[#allocation3 + %s25]]
      %s234 = scalar_lea.vmem %s4, %s233
      %v235 = vld [vmem:[%s234] sm:$0x1]
      %v236 = vld [vmem:[%s5] sm:$0x1]
      %v237 = vadd.f32 %v235, %v236
      %v238 = vmul.f32 %v237, %v224
      %v239 = vsel %vm227, %v238, 0.0
      %240 = vadd.xlane.f32.xlu0 %v239
      %v241 = vpop.xlane.xlu0 %240
      %v242 = vadd.f32 %v232, %v241
      %vm243 = vcmask 0
      %244 = vst.msk [vmem:[%s223] sm:$0x1] %vm243, %v242
      %p245 = scmp.lt.s32.totalorder %s25, 1
      %s246 = scalar_select %p245, %s25, 1
      %s247 = scalar_lea.vmem %s6, %s246
      // Predicated region
      $region41: #{discriminator_forward.13} parent=39 // pred_check
        %p248 = pneg %p153
      $region42: #{discriminator_forward.13} parent=39 // pred_check_branch
        %250 = sbr.rel (%p248) target = $region44
      $region43: #{discriminator_forward.13} parent=39 // pred_region
        _
      $region44: #{discriminator_forward.13} parent=39 // pred_fallthru
        _
    $region40: #{discriminator_forward.13} parent=5 // pred_fallthru
      _
    %p251 = scmp.le.s32.totalorder 2, %s20
    // Predicated region
    $region45: #{discriminator_forward.13} parent=5 // pred_check
      %p252 = pneg %p251
    $region46: #{discriminator_forward.13} parent=5 // pred_check_branch
      %254 = sbr.rel (%p252) target = $region48
    $region47: #{discriminator_forward.13} parent=5 // pred_region
      %s255 = ssub.s32 %s20, 2
      // Predicated region
      $region49: #{discriminator_forward.13} parent=47 // pred_check
        %p256 = pneg %p159
      $region50: #{discriminator_forward.13} parent=47 // pred_check_branch
        %258 = sbr.rel (%p256) target = $region52
      $region51: #{discriminator_forward.13} parent=47 // pred_region
        %p259 = scmp.lt.s32.totalorder %s26, 1
        %s260 = scalar_select %p259, %s26, 1
        %s261 = scalar_lea.vmem %s6, %s260
      $region52: #{discriminator_forward.13} parent=47 // pred_fallthru
        _
    $region48: #{discriminator_forward.13} parent=5 // pred_fallthru
      _
  $region6: #{discriminator_forward.13} parent=0 // loop_footer
    %s24 = sadd.s32 1, %s20
  $region7: #{discriminator_forward.13} parent=0 // loop_footer_branch
    %19 = sbr.rel target = $region3
  $region8: #{discriminator_forward.13} parent=0 // loop_exit
    _

</llo_original>
